<compile_context>
chip_gen: v7x
topology: tpu7x:2x2x1
jax: 0.10.0
libtpu: 0.0.40
codegen_flags: <defaults>
</compile_context>

<pallas_src>
import functools

import jax
import jax.numpy as jnp
from jax.experimental import pallas as pl
from jax.experimental.pallas import tpu as pltpu


def _round_up(x, m):
    return (x + m - 1) // m * m


def _largest_128_divisor(i, cap):
    """Largest multiple of 128 that divides `i` and is <= cap; None if no such tile."""
    best = None
    for cand in range(128, min(cap, i) + 1, 128):
        if i % cand == 0:
            best = cand
    return best


def _ln_epilogue(x_f32, b, res, g, beta, eps, out_dtype):
    """bias + dropout(identity) + residual + LayerNorm, all in f32."""
    x = x_f32 + b.astype(jnp.float32)
    # dropout: identity in eval mode
    x = x + res.astype(jnp.float32)

    inv_d = 1.0 / x.shape[-1]
    mean = jnp.sum(x, axis=-1, keepdims=True) * inv_d
    centered = x - mean
    # Two-pass variance: numerically safer than E[x^2] - mean^2.
    var = jnp.sum(centered * centered, axis=-1, keepdims=True) * inv_d
    y = centered * jax.lax.rsqrt(var + eps)
    y = y * g.astype(jnp.float32) + beta.astype(jnp.float32)
    return y.astype(out_dtype)


def _vd_output_resident_kernel(h_ref, w_ref, b_ref, res_ref, g_ref, be_ref, o_ref,
                               *, eps):
    # h_ref   : (tm, I)  activation tile (native dtype; cast to bf16 on the VPU here)
    # w_ref   : (I, D)   full dense weight (bf16, pre-transposed), resident across tiles
    # b_ref   : (1, D)   dense bias
    # res_ref : (tm, D)  residual (input_h) tile
    # g_ref   : (1, D)   LayerNorm gamma
    # be_ref  : (1, D)   LayerNorm beta
    # o_ref   : (tm, D)  output tile
    x = jnp.dot(h_ref[...].astype(jnp.bfloat16), w_ref[...],
                preferred_element_type=jnp.float32)
    o_ref[...] = _ln_epilogue(x, b_ref[...], res_ref[...], g_ref[...], be_ref[...],
                              eps, o_ref.dtype)


def _vd_output_ktiled_kernel(h_ref, w_ref, b_ref, res_ref, g_ref, be_ref, o_ref,
                             acc_ref, *, eps):
    # Fallback for weights too large to keep resident in VMEM.
    # h_ref : (tm, tk) ; w_ref : (tk, D) ; acc_ref : (tm, D) f32 scratch.
    k = pl.program_id(1)

    @pl.when(k == 0)
    def _():
        acc_ref[...] = jnp.zeros_like(acc_ref)

    acc_ref[...] += jnp.dot(h_ref[...].astype(jnp.bfloat16), w_ref[...],
                            preferred_element_type=jnp.float32)

    @pl.when(k == pl.num_programs(1) - 1)
    def _():
        o_ref[...] = _ln_epilogue(acc_ref[...], b_ref[...], res_ref[...],
                                  g_ref[...], be_ref[...], eps, o_ref.dtype)


def vd_output(h, input_h, w_t, b, gamma, beta, *, eps=1e-12,
              tm=256, tk=512,
              weight_resident_bytes=24 * 1024 * 1024,
              vmem_limit_bytes=None):
    """Fused dense + dropout(eval) + residual-add + LayerNorm.

    h:       [B, S, I]   intermediate activations (any float dtype; cast to bf16 in-kernel)
    input_h: [B, S, D]   residual stream (output dtype follows this)
    w_t:     [I, D]      dense weight, pre-transposed ONCE at parameter-load time
    b, gamma, beta: [D]
    """
    B, S, I = h.shape
    D = input_h.shape[-1]
    M = B * S

    h2 = h.reshape(M, I)                       # no cast, no pad (free reshape)
    r2 = input_h.reshape(M, D)
    wt = w_t.astype(jnp.bfloat16)              # parameter cast (do once at load time in practice)
    b2 = b.reshape(1, D)
    g2 = gamma.reshape(1, D)
    be2 = beta.reshape(1, D)

    h_bytes = jnp.dtype(h.dtype).itemsize
    res_bytes = jnp.dtype(input_h.dtype).itemsize
    out_bytes = res_bytes

    # Token tile: multiple of 16 (bf16 sublane packing); partial tail tile handled by
    # Pallas masking (LayerNorm is row-wise, garbage pad rows are discarded on store).
    tm_eff = max(16, min(_round_up(tm, 16), _round_up(M, 16)))
    grid_m = pl.cdiv(M, tm_eff)

    # Resident-weight fast path when the bf16 weight fits the per-core VMEM budget.
    resident = (I * D * 2) <= weight_resident_bytes
    tk_eff = I
    if not resident:
        tk_eff = _largest_128_divisor(I, max(tk, 128))
        if tk_eff is None:
            # No multiple-of-128 divisor of I: fall back to the resident path.
            # TODO(synk): for huge I not divisible by 128, pad I once at parameter-load time.
            resident = True
            tk_eff = I

    kernel_common = dict(eps=eps)
    cost = pl.CostEstimate(
        flops=2 * M * I * D,
        transcendentals=M,  # one rsqrt per row
        bytes_accessed=M * I * h_bytes + I * D * 2 + M * D * (res_bytes + out_bytes),
    )

    # VMEM budget derived from the actual tile footprint (+25% and 2 MiB headroom for
    # compiler scratch). On v7x (64 MiB/core) keep this <= ~48 MiB by shrinking tm.
    if vmem_limit_bytes is None:
        w_rows = I if resident else tk_eff
        need = 0
        need += 2 * tm_eff * (I if resident else tk_eff) * h_bytes   # h tiles (dbl-buffered)
        need += 2 * w_rows * D * 2                                   # bf16 weight
        need += 2 * tm_eff * D * res_bytes                           # residual tiles
        need += 2 * tm_eff * D * out_bytes                           # output tiles
        need += 0 if resident else tm_eff * D * 4                    # f32 accumulator
        need += 6 * D * 4                                            # bias/gamma/beta
        vmem_limit_bytes = max(32 * 1024 * 1024, int(need * 1.25) + (2 << 20))

    if resident:
        out = pl.pallas_call(
            functools.partial(_vd_output_resident_kernel, **kernel_common),
            out_shape=jax.ShapeDtypeStruct((M, D), input_h.dtype),
            grid_spec=pltpu.PrefetchScalarGridSpec(
                num_scalar_prefetch=0,
                grid=(grid_m,),
                in_specs=[
                    pl.BlockSpec((tm_eff, I), lambda i: (i, 0)),   # h tile
                    pl.BlockSpec((I, D), lambda i: (0, 0)),        # weight (resident)
                    pl.BlockSpec((1, D), lambda i: (0, 0)),        # bias
                    pl.BlockSpec((tm_eff, D), lambda i: (i, 0)),   # residual
                    pl.BlockSpec((1, D), lambda i: (0, 0)),        # gamma
                    pl.BlockSpec((1, D), lambda i: (0, 0)),        # beta
                ],
                out_specs=pl.BlockSpec((tm_eff, D), lambda i: (i, 0)),
            ),
            compiler_params=pltpu.CompilerParams(
                dimension_semantics=("parallel",),
                vmem_limit_bytes=vmem_limit_bytes,
            ),
            cost_estimate=cost,
        )(h2, wt, b2, r2, g2, be2)
    else:
        grid = (grid_m, I // tk_eff)
        out = pl.pallas_call(
            functools.partial(_vd_output_ktiled_kernel, **kernel_common),
            out_shape=jax.ShapeDtypeStruct((M, D), input_h.dtype),
            grid_spec=pltpu.PrefetchScalarGridSpec(
                num_scalar_prefetch=0,
                grid=grid,
                in_specs=[
                    pl.BlockSpec((tm_eff, tk_eff), lambda i, k: (i, k)),  # h tile
                    pl.BlockSpec((tk_eff, D), lambda i, k: (k, 0)),       # weight slab
                    pl.BlockSpec((1, D), lambda i, k: (0, 0)),            # bias
                    pl.BlockSpec((tm_eff, D), lambda i, k: (i, 0)),       # residual
                    pl.BlockSpec((1, D), lambda i, k: (0, 0)),            # gamma
                    pl.BlockSpec((1, D), lambda i, k: (0, 0)),            # beta
                ],
                out_specs=pl.BlockSpec((tm_eff, D), lambda i, k: (i, 0)),
                scratch_shapes=[pltpu.VMEM((tm_eff, D), jnp.float32)],
            ),
            compiler_params=pltpu.CompilerParams(
                dimension_semantics=("parallel", "arbitrary"),
                vmem_limit_bytes=vmem_limit_bytes,
            ),
            cost_estimate=cost,
        )(h2, wt, b2, r2, g2, be2)

    return out.reshape(B, S, D)


# ----------------------------------------------------------------------------------
# References & tests
# ----------------------------------------------------------------------------------

def _reference_f32(h, input_h, w, b, gamma, beta, eps=1e-12):
    x = jnp.einsum("bsi,di->bsd", h, w) + b
    x = x + input_h
    mean = jnp.mean(x, axis=-1, keepdims=True)
    var = jnp.mean((x - mean) ** 2, axis=-1, keepdims=True)
    return (x - mean) * jax.lax.rsqrt(var + eps) * gamma + beta


def _reference_bf16_matmul(h, input_h, w, b, gamma, beta, eps=1e-12):
    # Matches the kernel's bf16-operand / f32-accumulation matmul.
    hb = h.astype(jnp.bfloat16).astype(jnp.float32)
    wb = w.astype(jnp.bfloat16).astype(jnp.float32)
    x = jnp.einsum("bsi,di->bsd", hb, wb) + b
    x = x + input_h
    mean = jnp.mean(x, axis=-1, keepdims=True)
    var = jnp.mean((x - mean) ** 2, axis=-1, keepdims=True)
    return (x - mean) * jax.lax.rsqrt(var + eps) * gamma + beta


def _run_case(B, S, I, D, key, **kw):
    k1, k2, k3, k4 = jax.random.split(key, 4)
    h = jax.random.normal(k1, (B, S, I), dtype=jnp.float32)
    input_h = jax.random.normal(k2, (B, S, D), dtype=jnp.float32)

    # PyTorch Linear layout: weight [out=D, in=I]
    w = jax.random.normal(k3, (D, I), dtype=jnp.float32) * (1.0 / I) ** 0.5
    b = jax.random.normal(k4, (D,), dtype=jnp.float32) * 0.01
    gamma = jnp.ones((D,), dtype=jnp.float32)
    beta = jnp.zeros((D,), dtype=jnp.float32)

    # Pre-transpose the weight ONCE (parameter-load time), outside the hot path.
    w_t = jnp.asarray(w.T)  # [I, D]

    out = vd_output(h, input_h, w_t, b, gamma, beta, **kw)
    out = jax.block_until_ready(out)
    assert out.shape == (B, S, D)

    ref_tight = _reference_bf16_matmul(h, input_h, w, b, gamma, beta)
    ref_loose = _reference_f32(h, input_h, w, b, gamma, beta)
    assert jnp.allclose(out, ref_tight, atol=2e-3, rtol=2e-3), \
        "mismatch vs bf16-operand reference"
    assert jnp.allclose(out, ref_loose, atol=5e-2, rtol=5e-2), \
        "mismatch vs f32 reference"
    return out


if __name__ == "__main__":
    key = jax.random.PRNGKey(0)
    key1, key2, key3 = jax.random.split(key, 3)

    # Case 1: resident-weight path, lane-dense D, partial tail token tile
    # (M=384, tm=256 -> 2 tiles, second tile masked), token axis "parallel".
    _run_case(B=2, S=192, I=512, D=128, key=key1, tm=256)

    # Case 2: small / odd shapes — M=18 handled as a single partial tile,
    # sub-128 feature dims as full-extent blocks, weight resident.
    _run_case(B=2, S=9, I=96, D=64, key=key2, tm=256)

    # Case 3: forced K-tiled fallback (weight_resident_bytes=0): 3 K-steps with
    # f32 accumulator + pl.when init/finalize, "arbitrary" reduction axis last.
    _run_case(B=2, S=64, I=384, D=256, key=key3, tm=128, tk=128,
              weight_resident_bytes=0)

    print("KERNEL_OK")
</pallas_src>

<mosaic_0001>
module attributes {stable_mosaic.version = 11 : i64} {
  func.func @_vd_output_resident_kernel(%arg0: i32, %arg1: memref<256x512xf32, #tpu.memory_space<vmem>>, %arg2: memref<512x128xbf16, #tpu.memory_space<vmem>>, %arg3: memref<1x128xf32, #tpu.memory_space<vmem>>, %arg4: memref<256x128xf32, #tpu.memory_space<vmem>>, %arg5: memref<1x128xf32, #tpu.memory_space<vmem>>, %arg6: memref<1x128xf32, #tpu.memory_space<vmem>>, %arg7: memref<256x128xf32, #tpu.memory_space<vmem>>) attributes {dimension_semantics = [#tpu.dimension_semantics<parallel>], iteration_bounds = array<i64: 2>, scalar_prefetch = 0 : i64, scratch_operands = 0 : i64, tpu.core_type = #tpu.core_type<tc>, window_params = [{transform_indices = @transform_0, window_bounds = array<i64: 256, 512>}, {pipeline_mode = #tpu.pipeline_mode<synchronous>, transform_indices = @transform_1, window_bounds = array<i64: 512, 128>}, {pipeline_mode = #tpu.pipeline_mode<synchronous>, transform_indices = @transform_2, window_bounds = array<i64: 1, 128>}, {transform_indices = @transform_3, window_bounds = array<i64: 256, 128>}, {pipeline_mode = #tpu.pipeline_mode<synchronous>, transform_indices = @transform_4, window_bounds = array<i64: 1, 128>}, {pipeline_mode = #tpu.pipeline_mode<synchronous>, transform_indices = @transform_5, window_bounds = array<i64: 1, 128>}, {transform_indices = @transform_6, window_bounds = array<i64: 256, 128>}]} {
    %c0 = arith.constant 0 : index
    %c0_0 = arith.constant 0 : index
    %0 = vector.load %arg1[%c0, %c0_0] : memref<256x512xf32, #tpu.memory_space<vmem>>, vector<256x512xf32>
    %1 = arith.truncf %0 : vector<256x512xf32> to vector<256x512xbf16>
    %c0_1 = arith.constant 0 : index
    %c0_2 = arith.constant 0 : index
    %2 = vector.load %arg2[%c0_1, %c0_2] : memref<512x128xbf16, #tpu.memory_space<vmem>>, vector<512x128xbf16>
    %cst = arith.constant dense<0.000000e+00> : vector<256x128xf32>
    %3 = tpu.matmul %1, %2, %cst {dimension_numbers = #tpu.dot_dimension_numbers<[1], [0], [0], [1], [0, 0, 1, 1], [], []>} : vector<256x512xbf16>, vector<512x128xbf16>, vector<256x128xf32> -> vector<256x128xf32>
    %c0_3 = arith.constant 0 : index
    %c0_4 = arith.constant 0 : index
    %4 = vector.load %arg3[%c0_3, %c0_4] : memref<1x128xf32, #tpu.memory_space<vmem>>, vector<1x128xf32>
    %c0_5 = arith.constant 0 : index
    %c0_6 = arith.constant 0 : index
    %5 = vector.load %arg4[%c0_5, %c0_6] : memref<256x128xf32, #tpu.memory_space<vmem>>, vector<256x128xf32>
    %c0_7 = arith.constant 0 : index
    %c0_8 = arith.constant 0 : index
    %6 = vector.load %arg5[%c0_7, %c0_8] : memref<1x128xf32, #tpu.memory_space<vmem>>, vector<1x128xf32>
    %c0_9 = arith.constant 0 : index
    %c0_10 = arith.constant 0 : index
    %7 = vector.load %arg6[%c0_9, %c0_10] : memref<1x128xf32, #tpu.memory_space<vmem>>, vector<1x128xf32>
    %8 = vector.broadcast %4 : vector<1x128xf32> to vector<256x128xf32>
    %9 = arith.addf %3, %8 : vector<256x128xf32>
    %10 = arith.addf %9, %5 : vector<256x128xf32>
    %cst_11 = arith.constant dense<0.000000e+00> : vector<256xf32>
    %11 = vector.multi_reduction <add>, %10, %cst_11 [1] : vector<256x128xf32> to vector<256xf32>
    %12 = vector.shape_cast %11 : vector<256xf32> to vector<256x1xf32>
    %cst_12 = arith.constant 7.812500e-03 : f32
    %13 = vector.broadcast %cst_12 : f32 to vector<256x1xf32>
    %14 = arith.mulf %12, %13 : vector<256x1xf32>
    %15 = vector.broadcast %14 : vector<256x1xf32> to vector<256x128xf32>
    %16 = arith.subf %10, %15 : vector<256x128xf32>
    %17 = arith.mulf %16, %16 : vector<256x128xf32>
    %cst_13 = arith.constant dense<0.000000e+00> : vector<256xf32>
    %18 = vector.multi_reduction <add>, %17, %cst_13 [1] : vector<256x128xf32> to vector<256xf32>
    %19 = vector.shape_cast %18 : vector<256xf32> to vector<256x1xf32>
    %cst_14 = arith.constant 7.812500e-03 : f32
    %20 = vector.broadcast %cst_14 : f32 to vector<256x1xf32>
    %21 = arith.mulf %19, %20 : vector<256x1xf32>
    %cst_15 = arith.constant 9.99999996E-13 : f32
    %22 = vector.broadcast %cst_15 : f32 to vector<256x1xf32>
    %23 = arith.addf %21, %22 : vector<256x1xf32>
    %24 = math.rsqrt %23 : vector<256x1xf32>
    %25 = vector.broadcast %24 : vector<256x1xf32> to vector<256x128xf32>
    %26 = arith.mulf %16, %25 : vector<256x128xf32>
    %27 = vector.broadcast %6 : vector<1x128xf32> to vector<256x128xf32>
    %28 = arith.mulf %26, %27 : vector<256x128xf32>
    %29 = vector.broadcast %7 : vector<1x128xf32> to vector<256x128xf32>
    %30 = arith.addf %28, %29 : vector<256x128xf32>
    %c0_16 = arith.constant 0 : index
    %c0_17 = arith.constant 0 : index
    %31 = vector.load %arg7[%c0_16, %c0_17] : memref<256x128xf32, #tpu.memory_space<vmem>>, vector<256x128xf32>
    tpu.vector_store %arg7[%c0_16, %c0_17], %30 {strides = array<i32>} : memref<256x128xf32, #tpu.memory_space<vmem>>, vector<256x128xf32>,
    return
  }
  func.func @transform_0(%arg0: i32) -> (i32, i32) {
    %c0_i32 = arith.constant 0 : i32
    %c0_i32_0 = arith.constant 0 : i32
    return %arg0, %c0_i32 : i32, i32
  }
  func.func @transform_1(%arg0: i32) -> (i32, i32) {
    %c0_i32 = arith.constant 0 : i32
    %c0_i32_0 = arith.constant 0 : i32
    %c0_i32_1 = arith.constant 0 : i32
    return %c0_i32, %c0_i32_0 : i32, i32
  }
  func.func @transform_2(%arg0: i32) -> (i32, i32) {
    %c0_i32 = arith.constant 0 : i32
    %c0_i32_0 = arith.constant 0 : i32
    %c0_i32_1 = arith.constant 0 : i32
    return %c0_i32, %c0_i32_0 : i32, i32
  }
  func.func @transform_3(%arg0: i32) -> (i32, i32) {
    %c0_i32 = arith.constant 0 : i32
    %c0_i32_0 = arith.constant 0 : i32
    return %arg0, %c0_i32 : i32, i32
  }
  func.func @transform_4(%arg0: i32) -> (i32, i32) {
    %c0_i32 = arith.constant 0 : i32
    %c0_i32_0 = arith.constant 0 : i32
    %c0_i32_1 = arith.constant 0 : i32
    return %c0_i32, %c0_i32_0 : i32, i32
  }
  func.func @transform_5(%arg0: i32) -> (i32, i32) {
    %c0_i32 = arith.constant 0 : i32
    %c0_i32_0 = arith.constant 0 : i32
    %c0_i32_1 = arith.constant 0 : i32
    return %c0_i32, %c0_i32_0 : i32, i32
  }
  func.func @transform_6(%arg0: i32) -> (i32, i32) {
    %c0_i32 = arith.constant 0 : i32
    %c0_i32_0 = arith.constant 0 : i32
    return %arg0, %c0_i32 : i32, i32
  }
}

</mosaic_0001>

<llo_original>
// kernel: tpu_custom_call.1
$region0: #{tpu_custom_call.1}
  #allocation0 [shape = 'u32[]', space=smem, size = 0x4, offset = 0x4, fixed_abs, tag = 'smem constant byte address 0x4 - core index']
  #allocation1 [shape = 'u32[144,128]{1,0:T(1,128)}', space=vmem, size = 0x12000, scoped, tag = 'internal scratch']
  %s0 = inlined_call_operand.hbm [shape: f32[384,512], index: 0, kind: input, shape index: {}]
  %s1 = inlined_call_operand.hbm [shape: bf16[512,128], index: 1, kind: input, shape index: {}]
  %s2 = inlined_call_operand.vmem [shape: f32[1,128], index: 2, kind: input, shape index: {}]
  %s3 = inlined_call_operand.hbm [shape: f32[384,128], index: 3, kind: input, shape index: {}]
  %s4 = inlined_call_operand.vmem [shape: f32[1,128], index: 4, kind: input, shape index: {}]
  %s5 = inlined_call_operand.vmem [shape: f32[1,128], index: 5, kind: input, shape index: {}]
  %s6 = inlined_call_operand.hbm [shape: f32[384,128], index: 6, kind: output, shape index: {}]
  %s7 = sld [smem:[#allocation0]]
  $region69: #{tpu_custom_call.1} parent=0
    _
  %s9 = ssub.s32 1, %s7
  %s10 = scalar_select 0, %s9, %s7
  $region1: #{tpu_custom_call.1} parent=0
    #allocation2 [shape = 'u8[1048576]{0}', space=vmem, size = 0x100000, scoped, tag = 'input window, operand 0']
    #allocation3 [shape = 's32[2]{0}', space=sflag, size = 0x8, scoped, tag = 'scoped memory for tpu_custom_call.1']
    #allocation4 [shape = 's32[2]{0}', space=sflag, size = 0x8, scoped, tag = 'scoped memory for tpu_custom_call.1']
    #allocation5 [shape = 'u8[131072]{0}', space=vmem, size = 0x20000, scoped, tag = 'input window, operand 1, single buffered']
    #allocation6 [shape = 's32[1]{0}', space=sflag, size = 0x4, scoped, tag = 'scoped memory for tpu_custom_call.1']
    #allocation7 [shape = 'u8[262144]{0}', space=vmem, size = 0x40000, scoped, tag = 'input window, operand 3']
    #allocation8 [shape = 'u8[262144]{0}', space=vmem, size = 0x40000, scoped, tag = 'output window, operand 0']
    %11 = vsyncpa [#allocation3], 0
    %s12 = scalar_lea.sflag [#allocation3], 1
    %13 = vsyncpa %s12, 0
    %14 = vsyncpa [#allocation6], 0
    %15 = vsyncpa [#allocation4], 0
    %s16 = scalar_lea.sflag [#allocation4], 1
    %17 = vsyncpa %s16, 0
    loop: start=0, step=1, limit=4
    $region2: #{tpu_custom_call.1} parent=1 // loop_pre_header
      _
    $region3: #{tpu_custom_call.1} parent=1 // loop_header
      %s19 = sphi 0, %s23
      %p20 = scmp.ge.s32.totalorder %s19, 4
      %s29 = sphi 0, %s31
      %s32 = sphi 0, %s29
      %s33 = sphi 0, %s32
      %s49 = sphi 0, %s33
      %s53 = sphi 0, %s53
      %s55 = sphi 0, %s53
      %s56 = sphi 0, %s55
      %s70 = sphi 0, %s56
      %s74 = sphi 0, %s74
      %s76 = sphi 0, %s74
      %s77 = sphi 0, %s76
      %s91 = sphi 0, %s77
      %s97 = sphi 0, %s99
      %s100 = sphi 0, %s97
      %s101 = sphi 0, %s100
      %s117 = sphi 0, %s101
      %s121 = sphi 0, %s121
      %s123 = sphi 0, %s121
      %s124 = sphi 0, %s123
      %s138 = sphi 0, %s124
      %s142 = sphi 0, %s142
      %s144 = sphi 0, %s142
      %s145 = sphi 0, %s144
      %s159 = sphi 0, %s145
      %s165 = sphi 0, %s167
      %s168 = sphi 0, %s165
      %s169 = sphi 0, %s168
      %s185 = sphi 0, %s169
    $region4: #{tpu_custom_call.1} parent=1 // loop_header_branch
      %22 = sbr.rel (%p20) target = $region8
    $region5: #{tpu_custom_call.1} parent=1 // loop_body
      %s24 = ssub.s32 %s19, 1
      %s25 = ssub.s32 %s19, 2
      %s26 = sadd.s32 %s19, 1
      %s27 = ssub.s32 %s19, %s26
      %p28 = scmp.eq.s32.totalorder %s27, 0
      %s30 = sadd.s32 %s29, 1
      %s31 = scalar_select %p28, %s29, %s30
      %p34 = pneg %p28
      %p35 = scmp.eq.s32.totalorder %s19, 1
      %p36 = por %p34, %p35
      %p37 = scmp.ne.s32.totalorder %s29, %s32
      %p38 = scmp.eq.s32.totalorder %s19, 0
      %p39 = por %p37, %p38
      %p40 = scmp.ne.s32.totalorder %s29, %s32
      %p41 = scmp.eq.s32.totalorder %s24, 1
      %p42 = por %p40, %p41
      %p43 = scmp.ne.s32.totalorder %s32, %s33
      %p44 = scmp.eq.s32.totalorder %s24, 0
      %p45 = por %p43, %p44
      %p46 = scmp.ne.s32.totalorder %s32, %s33
      %p47 = scmp.eq.s32.totalorder %s25, 1
      %p48 = por %p46, %p47
      %p50 = scmp.ne.s32.totalorder %s33, %s49
      %p51 = scmp.eq.s32.totalorder %s25, 0
      %p52 = por %p50, %p51
      %s54 = sadd.s32 %s53, 1
      %p57 = scmp.eq.s32.totalorder %s19, 1
      %p58 = scmp.ne.s32.totalorder %s53, %s55
      %p59 = scmp.eq.s32.totalorder %s19, 0
      %p60 = por %p58, %p59
      %p61 = scmp.ne.s32.totalorder %s53, %s55
      %p62 = scmp.eq.s32.totalorder %s24, 1
      %p63 = por %p61, %p62
      %p64 = scmp.ne.s32.totalorder %s55, %s56
      %p65 = scmp.eq.s32.totalorder %s24, 0
      %p66 = por %p64, %p65
      %p67 = scmp.ne.s32.totalorder %s55, %s56
      %p68 = scmp.eq.s32.totalorder %s25, 1
      %p69 = por %p67, %p68
      %p71 = scmp.ne.s32.totalorder %s56, %s70
      %p72 = scmp.eq.s32.totalorder %s25, 0
      %p73 = por %p71, %p72
      %s75 = sadd.s32 %s74, 1
      %p78 = scmp.eq.s32.totalorder %s19, 1
      %p79 = scmp.ne.s32.totalorder %s74, %s76
      %p80 = scmp.eq.s32.totalorder %s19, 0
      %p81 = por %p79, %p80
      %p82 = scmp.ne.s32.totalorder %s74, %s76
      %p83 = scmp.eq.s32.totalorder %s24, 1
      %p84 = por %p82, %p83
      %p85 = scmp.ne.s32.totalorder %s76, %s77
      %p86 = scmp.eq.s32.totalorder %s24, 0
      %p87 = por %p85, %p86
      %p88 = scmp.ne.s32.totalorder %s76, %s77
      %p89 = scmp.eq.s32.totalorder %s25, 1
      %p90 = por %p88, %p89
      %p92 = scmp.ne.s32.totalorder %s77, %s91
      %p93 = scmp.eq.s32.totalorder %s25, 0
      %p94 = por %p92, %p93
      %s95 = ssub.s32 %s19, %s26
      %p96 = scmp.eq.s32.totalorder %s95, 0
      %s98 = sadd.s32 %s97, 1
      %s99 = scalar_select %p96, %s97, %s98
      %p102 = pneg %p96
      %p103 = scmp.eq.s32.totalorder %s19, 1
      %p104 = por %p102, %p103
      %p105 = scmp.ne.s32.totalorder %s97, %s100
      %p106 = scmp.eq.s32.totalorder %s19, 0
      %p107 = por %p105, %p106
      %p108 = scmp.ne.s32.totalorder %s97, %s100
      %p109 = scmp.eq.s32.totalorder %s24, 1
      %p110 = por %p108, %p109
      %p111 = scmp.ne.s32.totalorder %s100, %s101
      %p112 = scmp.eq.s32.totalorder %s24, 0
      %p113 = por %p111, %p112
      %p114 = scmp.ne.s32.totalorder %s100, %s101
      %p115 = scmp.eq.s32.totalorder %s25, 1
      %p116 = por %p114, %p115
      %p118 = scmp.ne.s32.totalorder %s101, %s117
      %p119 = scmp.eq.s32.totalorder %s25, 0
      %p120 = por %p118, %p119
      %s122 = sadd.s32 %s121, 1
      %p125 = scmp.eq.s32.totalorder %s19, 1
      %p126 = scmp.ne.s32.totalorder %s121, %s123
      %p127 = scmp.eq.s32.totalorder %s19, 0
      %p128 = por %p126, %p127
      %p129 = scmp.ne.s32.totalorder %s121, %s123
      %p130 = scmp.eq.s32.totalorder %s24, 1
      %p131 = por %p129, %p130
      %p132 = scmp.ne.s32.totalorder %s123, %s124
      %p133 = scmp.eq.s32.totalorder %s24, 0
      %p134 = por %p132, %p133
      %p135 = scmp.ne.s32.totalorder %s123, %s124
      %p136 = scmp.eq.s32.totalorder %s25, 1
      %p137 = por %p135, %p136
      %p139 = scmp.ne.s32.totalorder %s124, %s138
      %p140 = scmp.eq.s32.totalorder %s25, 0
      %p141 = por %p139, %p140
      %s143 = sadd.s32 %s142, 1
      %p146 = scmp.eq.s32.totalorder %s19, 1
      %p147 = scmp.ne.s32.totalorder %s142, %s144
      %p148 = scmp.eq.s32.totalorder %s19, 0
      %p149 = por %p147, %p148
      %p150 = scmp.ne.s32.totalorder %s142, %s144
      %p151 = scmp.eq.s32.totalorder %s24, 1
      %p152 = por %p150, %p151
      %p153 = scmp.ne.s32.totalorder %s144, %s145
      %p154 = scmp.eq.s32.totalorder %s24, 0
      %p155 = por %p153, %p154
      %p156 = scmp.ne.s32.totalorder %s144, %s145
      %p157 = scmp.eq.s32.totalorder %s25, 1
      %p158 = por %p156, %p157
      %p160 = scmp.ne.s32.totalorder %s145, %s159
      %p161 = scmp.eq.s32.totalorder %s25, 0
      %p162 = por %p160, %p161
      %s163 = ssub.s32 %s19, %s26
      %p164 = scmp.eq.s32.totalorder %s163, 0
      %s166 = sadd.s32 %s165, 1
      %s167 = scalar_select %p164, %s165, %s166
      %p170 = pneg %p164
      %p171 = scmp.eq.s32.totalorder %s19, 1
      %p172 = por %p170, %p171
      %p173 = scmp.ne.s32.totalorder %s165, %s168
      %p174 = scmp.eq.s32.totalorder %s19, 0
      %p175 = por %p173, %p174
      %p176 = scmp.ne.s32.totalorder %s165, %s168
      %p177 = scmp.eq.s32.totalorder %s24, 1
      %p178 = por %p176, %p177
      %p179 = scmp.ne.s32.totalorder %s168, %s169
      %p180 = scmp.eq.s32.totalorder %s24, 0
      %p181 = por %p179, %p180
      %p182 = scmp.ne.s32.totalorder %s168, %s169
      %p183 = scmp.eq.s32.totalorder %s25, 1
      %p184 = por %p182, %p183
      %p186 = scmp.ne.s32.totalorder %s169, %s185
      %p187 = scmp.eq.s32.totalorder %s25, 0
      %p188 = por %p186, %p187
      %p189 = scmp.le.s32.totalorder 1, %s19
      %p190 = scmp.lt.s32.totalorder %s19, 3
      %p191 = pnand %p189, %p190
      %p192 = pneg %p191
      // Predicated region
      $region9: #{tpu_custom_call.1} parent=5 // pred_check
        _
      $region10: #{tpu_custom_call.1} parent=5 // pred_check_branch
        %194 = sbr.rel (%p191) target = $region12
      $region11: #{tpu_custom_call.1} parent=5 // pred_region
        %s195 = ssub.s32 %s19, 1
        // Predicated region
        $region13: #{tpu_custom_call.1} parent=11 // pred_check
          %p196 = pneg %p66
        $region14: #{tpu_custom_call.1} parent=11 // pred_check_branch
          %198 = sbr.rel (%p196) target = $region16
        $region15: #{tpu_custom_call.1} parent=11 // pred_region
          %s200 = ssub.s32 4096, 4096
          %201 = vsyncadd [#allocation6], %s200
          %s202 = sshll.u32 [#allocation5], 4
          %s203 = int_to_ptr.vmem [resolvable:$true] %s202
          %208 = dma.hbm_to_vmem [thread:$0]  %s1, 4096, %s203, [#allocation6], 64, 64, 4
        $region16: #{tpu_custom_call.1} parent=11 // pred_fallthru
          _
        // Predicated region
        $region17: #{tpu_custom_call.1} parent=11 // pred_check
          %p209 = pneg %p87
        $region18: #{tpu_custom_call.1} parent=11 // pred_check_branch
          %211 = sbr.rel (%p209) target = $region20
        $region19: #{tpu_custom_call.1} parent=11 // pred_region
          _
        $region20: #{tpu_custom_call.1} parent=11 // pred_fallthru
          _
        // Predicated region
        $region21: #{tpu_custom_call.1} parent=11 // pred_check
          %p212 = pneg %p134
        $region22: #{tpu_custom_call.1} parent=11 // pred_check_branch
          %214 = sbr.rel (%p212) target = $region24
        $region23: #{tpu_custom_call.1} parent=11 // pred_region
          _
        $region24: #{tpu_custom_call.1} parent=11 // pred_fallthru
          _
        // Predicated region
        $region25: #{tpu_custom_call.1} parent=11 // pred_check
          %p215 = pneg %p155
        $region26: #{tpu_custom_call.1} parent=11 // pred_check_branch
          %217 = sbr.rel (%p215) target = $region28
        $region27: #{tpu_custom_call.1} parent=11 // pred_region
          _
        $region28: #{tpu_custom_call.1} parent=11 // pred_fallthru
          _
      $region12: #{tpu_custom_call.1} parent=5 // pred_fallthru
        _
      %p218 = scmp.lt.s32.totalorder %s19, 2
      // Predicated region
      $region29: #{tpu_custom_call.1} parent=5 // pred_check
        %p219 = pneg %p218
      $region30: #{tpu_custom_call.1} parent=5 // pred_check_branch
        %221 = sbr.rel (%p219) target = $region32
      $region31: #{tpu_custom_call.1} parent=5 // pred_region
        // Predicated region
        $region33: #{tpu_custom_call.1} parent=31 // pred_check
          %p222 = pneg %p39
        $region34: #{tpu_custom_call.1} parent=31 // pred_check_branch
          %224 = sbr.rel (%p222) target = $region36
        $region35: #{tpu_custom_call.1} parent=31 // pred_region
          %s225 = sand.u32 %s19, 1
          %s226 = scalar_lea.sflag [#allocation3], %s225
          %s227 = sand.u32 %s29, 1
          %s228 = smul.addr %s227, 1024
          %s229 = scalar_lea.vmem [#allocation2], %s228
          %s230 = smul.u32 32, %s19
          %s231 = ssub.s32 48, %s230
          %p232 = scmp.lt.s32.totalorder %s231, 32
          %s233 = scalar_select %p232, %s231, 32
          %s234 = smul.u32 128, %s233
          %s235 = smul.u32 %s234, 4
          %s237 = ssub.s32 16384, %s235
          %238 = vsyncadd %s226, %s237
          %p239 = scmp.ne.s32.totalorder 0, %s235
          %s240 = smul.addr %s230, 4
          %s241 = smul.addr %s240, 128
          %s242 = scalar_lea.hbm %s0, %s241
          %s243 = smul.u32 32, %s233
          %s244 = sshll.u32 %s229, 4
          %s245 = int_to_ptr.vmem [resolvable:$true] %s244
          %s246 = sshll.u32 %s243, 4
          %250 = dma.hbm_to_vmem [thread:$0]  (%p239), %s242, %s246, %s245, %s226, 512, 512, 32
        $region36: #{tpu_custom_call.1} parent=31 // pred_fallthru
          _
        // Predicated region
        $region37: #{tpu_custom_call.1} parent=31 // pred_check
          %p251 = pneg %p107
        $region38: #{tpu_custom_call.1} parent=31 // pred_check_branch
          %253 = sbr.rel (%p251) target = $region40
        $region39: #{tpu_custom_call.1} parent=31 // pred_region
          %s254 = sand.u32 %s19, 1
          %s255 = scalar_lea.sflag [#allocation3], %s254
          %s256 = sand.u32 %s97, 1
          %s257 = smul.addr %s256, 256
          %s258 = scalar_lea.vmem [#allocation7], %s257
          %s259 = smul.u32 32, %s19
          %s260 = ssub.s32 48, %s259
          %p261 = scmp.lt.s32.totalorder %s260, 32
          %s262 = scalar_select %p261, %s260, 32
          %s263 = smul.u32 128, %s262
          %s265 = ssub.s32 4096, %s263
          %266 = vsyncadd %s255, %s265
          %p267 = scmp.ne.s32.totalorder 0, %s263
          %s268 = smul.addr %s259, 128
          %s269 = scalar_lea.hbm %s3, %s268
          %s270 = smul.u32 8, %s262
          %s271 = sshll.u32 %s258, 4
          %s272 = int_to_ptr.vmem [resolvable:$true] %s271
          %s273 = sshll.u32 %s270, 4
          %277 = dma.hbm_to_vmem [thread:$0]  (%p267), %s269, %s273, %s272, %s255, 128, 128, 8
        $region40: #{tpu_custom_call.1} parent=31 // pred_fallthru
          _
      $region32: #{tpu_custom_call.1} parent=5 // pred_fallthru
        _
      %p278 = scmp.le.s32.totalorder 1, %s19
      %p279 = scmp.lt.s32.totalorder %s19, 3
      %p280 = pnand %p278, %p279
      %p281 = pneg %p280
      // Predicated region
      $region41: #{tpu_custom_call.1} parent=5 // pred_check
        _
      $region42: #{tpu_custom_call.1} parent=5 // pred_check_branch
        %283 = sbr.rel (%p280) target = $region44
      $region43: #{tpu_custom_call.1} parent=5 // pred_region
        %s284 = ssub.s32 %s19, 1
        %s285 = sand.u32 %s24, 1
        %s286 = scalar_lea.sflag [#allocation3], %s285
        %s287 = sand.u32 %s32, 1
        %s288 = smul.addr %s287, 1024
        %s289 = scalar_lea.vmem [#allocation2], %s288
        // Predicated region
        $region45: #{tpu_custom_call.1} parent=43 // pred_check
          %p290 = pneg %p45
        $region46: #{tpu_custom_call.1} parent=43 // pred_check_branch
          %292 = sbr.rel (%p290) target = $region48
        $region47: #{tpu_custom_call.1} parent=43 // pred_region
          %293 = dma.done %s286, 16384
        $region48: #{tpu_custom_call.1} parent=43 // pred_fallthru
          _
        // Predicated region
        $region49: #{tpu_custom_call.1} parent=43 // pred_check
          %p294 = pneg %p66
        $region50: #{tpu_custom_call.1} parent=43 // pred_check_branch
          %296 = sbr.rel (%p294) target = $region52
        $region51: #{tpu_custom_call.1} parent=43 // pred_region
          %297 = dma.done [#allocation6], 4096
        $region52: #{tpu_custom_call.1} parent=43 // pred_fallthru
          _
        %s298 = sand.u32 %s24, 1
        %s299 = scalar_lea.sflag [#allocation3], %s298
        %s300 = sand.u32 %s100, 1
        %s301 = smul.addr %s300, 256
        %s302 = scalar_lea.vmem [#allocation7], %s301
        // Predicated region
        $region53: #{tpu_custom_call.1} parent=43 // pred_check
          %p303 = pneg %p113
        $region54: #{tpu_custom_call.1} parent=43 // pred_check_branch
          %305 = sbr.rel (%p303) target = $region56
        $region55: #{tpu_custom_call.1} parent=43 // pred_region
          %306 = dma.done %s299, 4096
        $region56: #{tpu_custom_call.1} parent=43 // pred_fallthru
          _
        %s307 = sand.u32 %s24, 1
        %s308 = scalar_lea.sflag [#allocation3], %s307
        %s309 = sand.u32 %s32, 1
        %s310 = smul.addr %s309, 1024
        %s311 = scalar_lea.vmem [#allocation2], %s310
        %p312 = pneg %p45
        %p313 = pneg %p42
        %p314 = pneg %p66
        %p315 = pneg %p63
        %p316 = pneg %p87
        %p317 = pneg %p84
        %s318 = sand.u32 %s24, 1
        %s319 = scalar_lea.sflag [#allocation3], %s318
        %s320 = sand.u32 %s100, 1
        %s321 = smul.addr %s320, 256
        %s322 = scalar_lea.vmem [#allocation7], %s321
        %p323 = pneg %p113
        %p324 = pneg %p110
        %p325 = pneg %p134
        %p326 = pneg %p131
        %p327 = pneg %p155
        %p328 = pneg %p152
        %p329 = pneg %p181
        %p330 = pneg %p178
        %s331 = sand.u32 %s168, 1
        %s332 = scalar_lea.sflag [#allocation4], %s331
        %s333 = sand.u32 %s168, 1
        %s334 = smul.addr %s333, 256
        %s335 = scalar_lea.vmem [#allocation8], %s334
        %s336 = smul.u32 32, %s24
        %s337 = ssub.s32 48, %s336
        %p338 = scmp.lt.s32.totalorder %s337, 32
        %s339 = scalar_select %p338, %s337, 32
        %s340 = smul.u32 128, %s339
        %s341 = smul.u32 %s340, 4
        %s342 = smul.u32 32, %s24
        %s343 = ssub.s32 48, %s342
        %p344 = scmp.lt.s32.totalorder %s343, 32
        %s345 = scalar_select %p344, %s343, 32
        %s346 = smul.u32 128, %s345
        %s347 = smul.u32 32, %s24
        %s348 = ssub.s32 48, %s347
        %p349 = scmp.lt.s32.totalorder %s348, 32
        %s350 = scalar_select %p349, %s348, 32
        %s351 = smul.u32 128, %s350
        %v353 = vld [vmem:[%s289] sm:$0xff]
        %v354 = vld [vmem:[%s289 + $0x8] sm:$0xff]
        %v355 = vld [vmem:[%s289 + $0x10] sm:$0xff]
        %v356 = vld [vmem:[%s289 + $0x18] sm:$0xff]
        %v357 = vld [vmem:[%s289 + $0x20] sm:$0xff]
        %v358 = vld [vmem:[%s289 + $0x28] sm:$0xff]
        %v359 = vld [vmem:[%s289 + $0x30] sm:$0xff]
        %v360 = vld [vmem:[%s289 + $0x38] sm:$0xff]
        %v361 = vld [vmem:[%s289 + $0x40] sm:$0xff]
        %v362 = vld [vmem:[%s289 + $0x48] sm:$0xff]
        %v363 = vld [vmem:[%s289 + $0x50] sm:$0xff]
        %v364 = vld [vmem:[%s289 + $0x58] sm:$0xff]
        %v365 = vld [vmem:[%s289 + $0x60] sm:$0xff]
        %v366 = vld [vmem:[%s289 + $0x68] sm:$0xff]
        %v367 = vld [vmem:[%s289 + $0x70] sm:$0xff]
        %v368 = vld [vmem:[%s289 + $0x78] sm:$0xff]
        %v369 = vld [vmem:[%s289 + $0x80] sm:$0xff]
        %v370 = vld [vmem:[%s289 + $0x88] sm:$0xff]
        %v371 = vld [vmem:[%s289 + $0x90] sm:$0xff]
        %v372 = vld [vmem:[%s289 + $0x98] sm:$0xff]
        %v373 = vld [vmem:[%s289 + $0xa0] sm:$0xff]
        %v374 = vld [vmem:[%s289 + $0xa8] sm:$0xff]
        %v375 = vld [vmem:[%s289 + $0xb0] sm:$0xff]
        %v376 = vld [vmem:[%s289 + $0xb8] sm:$0xff]
        %v377 = vld [vmem:[%s289 + $0xc0] sm:$0xff]
        %v378 = vld [vmem:[%s289 + $0xc8] sm:$0xff]
        %v379 = vld [vmem:[%s289 + $0xd0] sm:$0xff]
        %v380 = vld [vmem:[%s289 + $0xd8] sm:$0xff]
        %v381 = vld [vmem:[%s289 + $0xe0] sm:$0xff]
        %v382 = vld [vmem:[%s289 + $0xe8] sm:$0xff]
        %v383 = vld [vmem:[%s289 + $0xf0] sm:$0xff]
        %v384 = vld [vmem:[%s289 + $0xf8] sm:$0xff]
        %v385 = vld [vmem:[%s289 + $0x100] sm:$0xff]
        %v386 = vld [vmem:[%s289 + $0x108] sm:$0xff]
        %v387 = vld [vmem:[%s289 + $0x110] sm:$0xff]
        %v388 = vld [vmem:[%s289 + $0x118] sm:$0xff]
        %v389 = vld [vmem:[%s289 + $0x120] sm:$0xff]
        %v390 = vld [vmem:[%s289 + $0x128] sm:$0xff]
        %v391 = vld [vmem:[%s289 + $0x130] sm:$0xff]
        %v392 = vld [vmem:[%s289 + $0x138] sm:$0xff]
        %v393 = vld [vmem:[%s289 + $0x140] sm:$0xff]
        %v394 = vld [vmem:[%s289 + $0x148] sm:$0xff]
        %v395 = vld [vmem:[%s289 + $0x150] sm:$0xff]
        %v396 = vld [vmem:[%s289 + $0x158] sm:$0xff]
        %v397 = vld [vmem:[%s289 + $0x160] sm:$0xff]
        %v398 = vld [vmem:[%s289 + $0x168] sm:$0xff]
        %v399 = vld [vmem:[%s289 + $0x170] sm:$0xff]
        %v400 = vld [vmem:[%s289 + $0x178] sm:$0xff]
        %v401 = vld [vmem:[%s289 + $0x180] sm:$0xff]
        %v402 = vld [vmem:[%s289 + $0x188] sm:$0xff]
        %v403 = vld [vmem:[%s289 + $0x190] sm:$0xff]
        %v404 = vld [vmem:[%s289 + $0x198] sm:$0xff]
        %v405 = vld [vmem:[%s289 + $0x1a0] sm:$0xff]
        %v406 = vld [vmem:[%s289 + $0x1a8] sm:$0xff]
        %v407 = vld [vmem:[%s289 + $0x1b0] sm:$0xff]
        %v408 = vld [vmem:[%s289 + $0x1b8] sm:$0xff]
        %v409 = vld [vmem:[%s289 + $0x1c0] sm:$0xff]
        %v410 = vld [vmem:[%s289 + $0x1c8] sm:$0xff]
        %v411 = vld [vmem:[%s289 + $0x1d0] sm:$0xff]
        %v412 = vld [vmem:[%s289 + $0x1d8] sm:$0xff]
        %v413 = vld [vmem:[%s289 + $0x1e0] sm:$0xff]
        %v414 = vld [vmem:[%s289 + $0x1e8] sm:$0xff]
        %v415 = vld [vmem:[%s289 + $0x1f0] sm:$0xff]
        %v416 = vld [vmem:[%s289 + $0x1f8] sm:$0xff]
        %v417 = vld [vmem:[%s289 + $0x200] sm:$0xff]
        %v418 = vld [vmem:[%s289 + $0x208] sm:$0xff]
        %v419 = vld [vmem:[%s289 + $0x210] sm:$0xff]
        %v420 = vld [vmem:[%s289 + $0x218] sm:$0xff]
        %v421 = vld [vmem:[%s289 + $0x220] sm:$0xff]
        %v422 = vld [vmem:[%s289 + $0x228] sm:$0xff]
        %v423 = vld [vmem:[%s289 + $0x230] sm:$0xff]
        %v424 = vld [vmem:[%s289 + $0x238] sm:$0xff]
        %v425 = vld [vmem:[%s289 + $0x240] sm:$0xff]
        %v426 = vld [vmem:[%s289 + $0x248] sm:$0xff]
        %v427 = vld [vmem:[%s289 + $0x250] sm:$0xff]
        %v428 = vld [vmem:[%s289 + $0x258] sm:$0xff]
        %v429 = vld [vmem:[%s289 + $0x260] sm:$0xff]
        %v430 = vld [vmem:[%s289 + $0x268] sm:$0xff]
        %v431 = vld [vmem:[%s289 + $0x270] sm:$0xff]
        %v432 = vld [vmem:[%s289 + $0x278] sm:$0xff]
        %v433 = vld [vmem:[%s289 + $0x280] sm:$0xff]
        %v434 = vld [vmem:[%s289 + $0x288] sm:$0xff]
        %v435 = vld [vmem:[%s289 + $0x290] sm:$0xff]
        %v436 = vld [vmem:[%s289 + $0x298] sm:$0xff]
        %v437 = vld [vmem:[%s289 + $0x2a0] sm:$0xff]
        %v438 = vld [vmem:[%s289 + $0x2a8] sm:$0xff]
        %v439 = vld [vmem:[%s289 + $0x2b0] sm:$0xff]
        %v440 = vld [vmem:[%s289 + $0x2b8] sm:$0xff]
        %v441 = vld [vmem:[%s289 + $0x2c0] sm:$0xff]
        %v442 = vld [vmem:[%s289 + $0x2c8] sm:$0xff]
        %v443 = vld [vmem:[%s289 + $0x2d0] sm:$0xff]
        %v444 = vld [vmem:[%s289 + $0x2d8] sm:$0xff]
        %v445 = vld [vmem:[%s289 + $0x2e0] sm:$0xff]
        %v446 = vld [vmem:[%s289 + $0x2e8] sm:$0xff]
        %v447 = vld [vmem:[%s289 + $0x2f0] sm:$0xff]
        %v448 = vld [vmem:[%s289 + $0x2f8] sm:$0xff]
        %v449 = vld [vmem:[%s289 + $0x300] sm:$0xff]
        %v450 = vld [vmem:[%s289 + $0x308] sm:$0xff]
        %v451 = vld [vmem:[%s289 + $0x310] sm:$0xff]
        %v452 = vld [vmem:[%s289 + $0x318] sm:$0xff]
        %v453 = vld [vmem:[%s289 + $0x320] sm:$0xff]
        %v454 = vld [vmem:[%s289 + $0x328] sm:$0xff]
        %v455 = vld [vmem:[%s289 + $0x330] sm:$0xff]
        %v456 = vld [vmem:[%s289 + $0x338] sm:$0xff]
        %v457 = vld [vmem:[%s289 + $0x340] sm:$0xff]
        %v458 = vld [vmem:[%s289 + $0x348] sm:$0xff]
        %v459 = vld [vmem:[%s289 + $0x350] sm:$0xff]
        %v460 = vld [vmem:[%s289 + $0x358] sm:$0xff]
        %v461 = vld [vmem:[%s289 + $0x360] sm:$0xff]
        %v462 = vld [vmem:[%s289 + $0x368] sm:$0xff]
        %v463 = vld [vmem:[%s289 + $0x370] sm:$0xff]
        %v464 = vld [vmem:[%s289 + $0x378] sm:$0xff]
        %v465 = vld [vmem:[%s289 + $0x380] sm:$0xff]
        %v466 = vld [vmem:[%s289 + $0x388] sm:$0xff]
        %v467 = vld [vmem:[%s289 + $0x390] sm:$0xff]
        %v468 = vld [vmem:[%s289 + $0x398] sm:$0xff]
        %v469 = vld [vmem:[%s289 + $0x3a0] sm:$0xff]
        %v470 = vld [vmem:[%s289 + $0x3a8] sm:$0xff]
        %v471 = vld [vmem:[%s289 + $0x3b0] sm:$0xff]
        %v472 = vld [vmem:[%s289 + $0x3b8] sm:$0xff]
        %v473 = vld [vmem:[%s289 + $0x3c0] sm:$0xff]
        %v474 = vld [vmem:[%s289 + $0x3c8] sm:$0xff]
        %v475 = vld [vmem:[%s289 + $0x3d0] sm:$0xff]
        %v476 = vld [vmem:[%s289 + $0x3d8] sm:$0xff]
        %v477 = vld [vmem:[%s289 + $0x3e0] sm:$0xff]
        %v478 = vld [vmem:[%s289 + $0x3e8] sm:$0xff]
        %v479 = vld [vmem:[%s289 + $0x3f0] sm:$0xff]
        %v480 = vld [vmem:[%s289 + $0x3f8] sm:$0xff]
        %v481 = vpack.c.bf16 %v357, %v353
        %v482 = vpack.c.bf16 %v358, %v354
        %v483 = vpack.c.bf16 %v359, %v355
        %v484 = vpack.c.bf16 %v360, %v356
        %v485 = vpack.c.bf16 %v365, %v361
        %v486 = vpack.c.bf16 %v366, %v362
        %v487 = vpack.c.bf16 %v367, %v363
        %v488 = vpack.c.bf16 %v368, %v364
        %v489 = vpack.c.bf16 %v373, %v369
        %v490 = vpack.c.bf16 %v374, %v370
        %v491 = vpack.c.bf16 %v375, %v371
        %v492 = vpack.c.bf16 %v376, %v372
        %v493 = vpack.c.bf16 %v381, %v377
        %v494 = vpack.c.bf16 %v382, %v378
        %v495 = vpack.c.bf16 %v383, %v379
        %v496 = vpack.c.bf16 %v384, %v380
        %v497 = vpack.c.bf16 %v389, %v385
        %v498 = vpack.c.bf16 %v390, %v386
        %v499 = vpack.c.bf16 %v391, %v387
        %v500 = vpack.c.bf16 %v392, %v388
        %v501 = vpack.c.bf16 %v397, %v393
        %v502 = vpack.c.bf16 %v398, %v394
        %v503 = vpack.c.bf16 %v399, %v395
        %v504 = vpack.c.bf16 %v400, %v396
        %v505 = vpack.c.bf16 %v405, %v401
        %v506 = vpack.c.bf16 %v406, %v402
        %v507 = vpack.c.bf16 %v407, %v403
        %v508 = vpack.c.bf16 %v408, %v404
        %v509 = vpack.c.bf16 %v413, %v409
        %v510 = vpack.c.bf16 %v414, %v410
        %v511 = vpack.c.bf16 %v415, %v411
        %v512 = vpack.c.bf16 %v416, %v412
        %v513 = vpack.c.bf16 %v421, %v417
        %v514 = vpack.c.bf16 %v422, %v418
        %v515 = vpack.c.bf16 %v423, %v419
        %v516 = vpack.c.bf16 %v424, %v420
        %v517 = vpack.c.bf16 %v429, %v425
        %v518 = vpack.c.bf16 %v430, %v426
        %v519 = vpack.c.bf16 %v431, %v427
        %v520 = vpack.c.bf16 %v432, %v428
        %v521 = vpack.c.bf16 %v437, %v433
        %v522 = vpack.c.bf16 %v438, %v434
        %v523 = vpack.c.bf16 %v439, %v435
        %v524 = vpack.c.bf16 %v440, %v436
        %v525 = vpack.c.bf16 %v445, %v441
        %v526 = vpack.c.bf16 %v446, %v442
        %v527 = vpack.c.bf16 %v447, %v443
        %v528 = vpack.c.bf16 %v448, %v444
        %v529 = vpack.c.bf16 %v453, %v449
        %v530 = vpack.c.bf16 %v454, %v450
        %v531 = vpack.c.bf16 %v455, %v451
        %v532 = vpack.c.bf16 %v456, %v452
        %v533 = vpack.c.bf16 %v461, %v457
        %v534 = vpack.c.bf16 %v462, %v458
        %v535 = vpack.c.bf16 %v463, %v459
        %v536 = vpack.c.bf16 %v464, %v460
        %v537 = vpack.c.bf16 %v469, %v465
        %v538 = vpack.c.bf16 %v470, %v466
        %v539 = vpack.c.bf16 %v471, %v467
        %v540 = vpack.c.bf16 %v472, %v468
        %v541 = vpack.c.bf16 %v477, %v473
        %v542 = vpack.c.bf16 %v478, %v474
        %v543 = vpack.c.bf16 %v479, %v475
        %v544 = vpack.c.bf16 %v480, %v476
        %v545 = vld [vmem:[#allocation5] sm:$0xf]
        %v546 = vld [vmem:[#allocation5 + $0x4] sm:$0xf]
        %v547 = vld [vmem:[#allocation5 + $0x8] sm:$0xf]
        %v548 = vld [vmem:[#allocation5 + $0xc] sm:$0xf]
        %v549 = vld [vmem:[#allocation5 + $0x10] sm:$0xf]
        %v550 = vld [vmem:[#allocation5 + $0x14] sm:$0xf]
        %v551 = vld [vmem:[#allocation5 + $0x18] sm:$0xf]
        %v552 = vld [vmem:[#allocation5 + $0x1c] sm:$0xf]
        %v553 = vld [vmem:[#allocation5 + $0x20] sm:$0xf]
        %v554 = vld [vmem:[#allocation5 + $0x24] sm:$0xf]
        %v555 = vld [vmem:[#allocation5 + $0x28] sm:$0xf]
        %v556 = vld [vmem:[#allocation5 + $0x2c] sm:$0xf]
        %v557 = vld [vmem:[#allocation5 + $0x30] sm:$0xf]
        %v558 = vld [vmem:[#allocation5 + $0x34] sm:$0xf]
        %v559 = vld [vmem:[#allocation5 + $0x38] sm:$0xf]
        %v560 = vld [vmem:[#allocation5 + $0x3c] sm:$0xf]
        %v561 = vld [vmem:[#allocation5 + $0x40] sm:$0xf]
        %v562 = vld [vmem:[#allocation5 + $0x44] sm:$0xf]
        %v563 = vld [vmem:[#allocation5 + $0x48] sm:$0xf]
        %v564 = vld [vmem:[#allocation5 + $0x4c] sm:$0xf]
        %v565 = vld [vmem:[#allocation5 + $0x50] sm:$0xf]
        %v566 = vld [vmem:[#allocation5 + $0x54] sm:$0xf]
        %v567 = vld [vmem:[#allocation5 + $0x58] sm:$0xf]
        %v568 = vld [vmem:[#allocation5 + $0x5c] sm:$0xf]
        %v569 = vld [vmem:[#allocation5 + $0x60] sm:$0xf]
        %v570 = vld [vmem:[#allocation5 + $0x64] sm:$0xf]
        %v571 = vld [vmem:[#allocation5 + $0x68] sm:$0xf]
        %v572 = vld [vmem:[#allocation5 + $0x6c] sm:$0xf]
        %v573 = vld [vmem:[#allocation5 + $0x70] sm:$0xf]
        %v574 = vld [vmem:[#allocation5 + $0x74] sm:$0xf]
        %v575 = vld [vmem:[#allocation5 + $0x78] sm:$0xf]
        %v576 = vld [vmem:[#allocation5 + $0x7c] sm:$0xf]
        %v577 = vld [vmem:[#allocation5 + $0x80] sm:$0xf]
        %v578 = vld [vmem:[#allocation5 + $0x84] sm:$0xf]
        %v579 = vld [vmem:[#allocation5 + $0x88] sm:$0xf]
        %v580 = vld [vmem:[#allocation5 + $0x8c] sm:$0xf]
        %v581 = vld [vmem:[#allocation5 + $0x90] sm:$0xf]
        %v582 = vld [vmem:[#allocation5 + $0x94] sm:$0xf]
        %v583 = vld [vmem:[#allocation5 + $0x98] sm:$0xf]
        %v584 = vld [vmem:[#allocation5 + $0x9c] sm:$0xf]
        %v585 = vld [vmem:[#allocation5 + $0xa0] sm:$0xf]
        %v586 = vld [vmem:[#allocation5 + $0xa4] sm:$0xf]
        %v587 = vld [vmem:[#allocation5 + $0xa8] sm:$0xf]
        %v588 = vld [vmem:[#allocation5 + $0xac] sm:$0xf]
        %v589 = vld [vmem:[#allocation5 + $0xb0] sm:$0xf]
        %v590 = vld [vmem:[#allocation5 + $0xb4] sm:$0xf]
        %v591 = vld [vmem:[#allocation5 + $0xb8] sm:$0xf]
        %v592 = vld [vmem:[#allocation5 + $0xbc] sm:$0xf]
        %v593 = vld [vmem:[#allocation5 + $0xc0] sm:$0xf]
        %v594 = vld [vmem:[#allocation5 + $0xc4] sm:$0xf]
        %v595 = vld [vmem:[#allocation5 + $0xc8] sm:$0xf]
        %v596 = vld [vmem:[#allocation5 + $0xcc] sm:$0xf]
        %v597 = vld [vmem:[#allocation5 + $0xd0] sm:$0xf]
        %v598 = vld [vmem:[#allocation5 + $0xd4] sm:$0xf]
        %v599 = vld [vmem:[#allocation5 + $0xd8] sm:$0xf]
        %v600 = vld [vmem:[#allocation5 + $0xdc] sm:$0xf]
        %v601 = vld [vmem:[#allocation5 + $0xe0] sm:$0xf]
        %v602 = vld [vmem:[#allocation5 + $0xe4] sm:$0xf]
        %v603 = vld [vmem:[#allocation5 + $0xe8] sm:$0xf]
        %v604 = vld [vmem:[#allocation5 + $0xec] sm:$0xf]
        %v605 = vld [vmem:[#allocation5 + $0xf0] sm:$0xf]
        %v606 = vld [vmem:[#allocation5 + $0xf4] sm:$0xf]
        %v607 = vld [vmem:[#allocation5 + $0xf8] sm:$0xf]
        %v608 = vld [vmem:[#allocation5 + $0xfc] sm:$0xf]
        %v609 = vld [vmem:[%s2] sm:$0x1]
        %v610 = vld [vmem:[%s302] sm:$0xff]
        %v611 = vld [vmem:[%s302 + $0x8] sm:$0xff]
        %v612 = vld [vmem:[%s302 + $0x10] sm:$0xff]
        %v613 = vld [vmem:[%s302 + $0x18] sm:$0xff]
        %v614 = vld [vmem:[%s302 + $0x20] sm:$0xff]
        %v615 = vld [vmem:[%s302 + $0x28] sm:$0xff]
        %v616 = vld [vmem:[%s302 + $0x30] sm:$0xff]
        %v617 = vld [vmem:[%s302 + $0x38] sm:$0xff]
        %v618 = vld [vmem:[%s302 + $0x40] sm:$0xff]
        %v619 = vld [vmem:[%s302 + $0x48] sm:$0xff]
        %v620 = vld [vmem:[%s302 + $0x50] sm:$0xff]
        %v621 = vld [vmem:[%s302 + $0x58] sm:$0xff]
        %v622 = vld [vmem:[%s302 + $0x60] sm:$0xff]
        %v623 = vld [vmem:[%s302 + $0x68] sm:$0xff]
        %v624 = vld [vmem:[%s302 + $0x70] sm:$0xff]
        %v625 = vld [vmem:[%s302 + $0x78] sm:$0xff]
        %v626 = vld [vmem:[%s302 + $0x80] sm:$0xff]
        %v627 = vld [vmem:[%s302 + $0x88] sm:$0xff]
        %v628 = vld [vmem:[%s302 + $0x90] sm:$0xff]
        %v629 = vld [vmem:[%s302 + $0x98] sm:$0xff]
        %v630 = vld [vmem:[%s302 + $0xa0] sm:$0xff]
        %v631 = vld [vmem:[%s302 + $0xa8] sm:$0xff]
        %v632 = vld [vmem:[%s302 + $0xb0] sm:$0xff]
        %v633 = vld [vmem:[%s302 + $0xb8] sm:$0xff]
        %v634 = vld [vmem:[%s302 + $0xc0] sm:$0xff]
        %v635 = vld [vmem:[%s302 + $0xc8] sm:$0xff]
        %v636 = vld [vmem:[%s302 + $0xd0] sm:$0xff]
        %v637 = vld [vmem:[%s302 + $0xd8] sm:$0xff]
        %v638 = vld [vmem:[%s302 + $0xe0] sm:$0xff]
        %v639 = vld [vmem:[%s302 + $0xe8] sm:$0xff]
        %v640 = vld [vmem:[%s302 + $0xf0] sm:$0xff]
        %v641 = vld [vmem:[%s302 + $0xf8] sm:$0xff]
        %v642 = vld [vmem:[%s4] sm:$0x1]
        %v643 = vld [vmem:[%s5] sm:$0x1]
        %v645 = vlaneseq
        %v646 = vshrl.u32 %v645, 7
        %v647 = vsub.s32 0, %v646
        %v648 = vrot.slane %v609, %v647
        %v714 = vunpack.c.l.b16 %v545
        %v715 = vunpack.c.l.b16 %v546
        %v716 = vunpack.c.l.b16 %v547
        %v717 = vunpack.c.l.b16 %v548
        %v718 = vunpack.c.l.b16 %v549
        %v719 = vunpack.c.l.b16 %v550
        %v720 = vunpack.c.l.b16 %v551
        %v721 = vunpack.c.l.b16 %v552
        %v722 = vunpack.c.l.b16 %v553
        %v723 = vunpack.c.l.b16 %v554
        %v724 = vunpack.c.l.b16 %v555
        %v725 = vunpack.c.l.b16 %v556
        %v726 = vunpack.c.l.b16 %v557
        %v727 = vunpack.c.l.b16 %v558
        %v728 = vunpack.c.l.b16 %v559
        %v729 = vunpack.c.l.b16 %v560
        %v730 = vunpack.c.l.b16 %v561
        %v731 = vunpack.c.l.b16 %v562
        %v732 = vunpack.c.l.b16 %v563
        %v733 = vunpack.c.l.b16 %v564
        %v734 = vunpack.c.l.b16 %v565
        %v735 = vunpack.c.l.b16 %v566
        %v736 = vunpack.c.l.b16 %v567
        %v737 = vunpack.c.l.b16 %v568
        %v738 = vunpack.c.l.b16 %v569
        %v739 = vunpack.c.l.b16 %v570
        %v740 = vunpack.c.l.b16 %v571
        %v741 = vunpack.c.l.b16 %v572
        %v742 = vunpack.c.l.b16 %v573
        %v743 = vunpack.c.l.b16 %v574
        %v744 = vunpack.c.l.b16 %v575
        %v745 = vunpack.c.l.b16 %v576
        %v746 = vunpack.c.l.b16 %v577
        %v747 = vunpack.c.l.b16 %v578
        %v748 = vunpack.c.l.b16 %v579
        %v749 = vunpack.c.l.b16 %v580
        %v750 = vunpack.c.l.b16 %v581
        %v751 = vunpack.c.l.b16 %v582
        %v752 = vunpack.c.l.b16 %v583
        %v753 = vunpack.c.l.b16 %v584
        %v754 = vunpack.c.l.b16 %v585
        %v755 = vunpack.c.l.b16 %v586
        %v756 = vunpack.c.l.b16 %v587
        %v757 = vunpack.c.l.b16 %v588
        %v758 = vunpack.c.l.b16 %v589
        %v759 = vunpack.c.l.b16 %v590
        %v760 = vunpack.c.l.b16 %v591
        %v761 = vunpack.c.l.b16 %v592
        %v762 = vunpack.c.l.b16 %v593
        %v763 = vunpack.c.l.b16 %v594
        %v764 = vunpack.c.l.b16 %v595
        %v765 = vunpack.c.l.b16 %v596
        %v766 = vunpack.c.l.b16 %v597
        %v767 = vunpack.c.l.b16 %v598
        %v768 = vunpack.c.l.b16 %v599
        %v769 = vunpack.c.l.b16 %v600
        %v770 = vunpack.c.l.b16 %v601
        %v771 = vunpack.c.l.b16 %v602
        %v772 = vunpack.c.l.b16 %v603
        %v773 = vunpack.c.l.b16 %v604
        %v774 = vunpack.c.l.b16 %v605
        %v775 = vunpack.c.l.b16 %v606
        %v776 = vunpack.c.l.b16 %v607
        %v777 = vunpack.c.l.b16 %v608
        %v778 = vpack.c.b16 %v715, %v714
        %v779 = vpack.c.b16 %v717, %v716
        %v780 = vpack.c.b16 %v719, %v718
        %v781 = vpack.c.b16 %v721, %v720
        %v782 = vpack.c.b16 %v723, %v722
        %v783 = vpack.c.b16 %v725, %v724
        %v784 = vpack.c.b16 %v727, %v726
        %v785 = vpack.c.b16 %v729, %v728
        %v786 = vpack.c.b16 %v731, %v730
        %v787 = vpack.c.b16 %v733, %v732
        %v788 = vpack.c.b16 %v735, %v734
        %v789 = vpack.c.b16 %v737, %v736
        %v790 = vpack.c.b16 %v739, %v738
        %v791 = vpack.c.b16 %v741, %v740
        %v792 = vpack.c.b16 %v743, %v742
        %v793 = vpack.c.b16 %v745, %v744
        %v794 = vpack.c.b16 %v747, %v746
        %v795 = vpack.c.b16 %v749, %v748
        %v796 = vpack.c.b16 %v751, %v750
        %v797 = vpack.c.b16 %v753, %v752
        %v798 = vpack.c.b16 %v755, %v754
        %v799 = vpack.c.b16 %v757, %v756
        %v800 = vpack.c.b16 %v759, %v758
        %v801 = vpack.c.b16 %v761, %v760
        %v802 = vpack.c.b16 %v763, %v762
        %v803 = vpack.c.b16 %v765, %v764
        %v804 = vpack.c.b16 %v767, %v766
        %v805 = vpack.c.b16 %v769, %v768
        %v806 = vpack.c.b16 %v771, %v770
        %v807 = vpack.c.b16 %v773, %v772
        %v808 = vpack.c.b16 %v775, %v774
        %v809 = vpack.c.b16 %v777, %v776
        %842 = vmatprep.subr.bf16.mxu0 0
        %843 = vmatpush1.bf16.msra.mxu0 %v778
        %844 = vmatprep.subr.bf16.mxu0 0
        %845 = vmatpush1.bf16.msra.mxu0 %v779
        %846 = vmatprep.subr.bf16.mxu0 0
        %847 = vmatpush1.bf16.msra.mxu0 %v780
        %848 = vmatprep.subr.bf16.mxu0 0
        %849 = vmatpush1.bf16.msra.mxu0 %v781
        %850 = vmatprep.subr.bf16.mxu0 0
        %851 = vmatpush1.bf16.msra.mxu0 %v782
        %852 = vmatprep.subr.bf16.mxu0 0
        %853 = vmatpush1.bf16.msra.mxu0 %v783
        %854 = vmatprep.subr.bf16.mxu0 0
        %855 = vmatpush1.bf16.msra.mxu0 %v784
        %856 = vmatprep.subr.bf16.mxu0 0
        %857 = vmatpush1.bf16.msra.mxu0 %v785
        %858 = vmatprep.subr.bf16.mxu0 0
        %859 = vmatpush1.bf16.msra.mxu0 %v786
        %860 = vmatprep.subr.bf16.mxu0 0
        %861 = vmatpush1.bf16.msra.mxu0 %v787
        %862 = vmatprep.subr.bf16.mxu0 0
        %863 = vmatpush1.bf16.msra.mxu0 %v788
        %864 = vmatprep.subr.bf16.mxu0 0
        %865 = vmatpush1.bf16.msra.mxu0 %v789
        %866 = vmatprep.subr.bf16.mxu0 0
        %867 = vmatpush1.bf16.msra.mxu0 %v790
        %868 = vmatprep.subr.bf16.mxu0 0
        %869 = vmatpush1.bf16.msra.mxu0 %v791
        %870 = vmatprep.subr.bf16.mxu0 0
        %871 = vmatpush1.bf16.msra.mxu0 %v792
        %872 = vmatprep.subr.bf16.mxu0 0
        %873 = vmatpush1.bf16.msra.mxu0 %v793
        %874 = vmatprep.mubr.bf16.mxu0 %v482
        %875 = vmatmul.mubr.bf16.gmra.mrb[0].mxu0 %v481
        %v876 = vpop.f32.mrb[0].mxu0
        %v877 = vadd.f32 %v648, %v876
        %v878 = vpop.f32.mrb[0].mxu0
        %v879 = vpop.f32.mrb[0].mxu0
        %v880 = vadd.f32 %v648, %v879
        %v881 = vpop.f32.mrb[0].mxu0
        %882 = vmatprep.mubr.bf16.mxu0 %v486
        %883 = vmatmul.mubr.bf16.gmra.mrb[0].mxu0 %v485
        %v884 = vpop.f32.mrb[0].mxu0
        %v885 = vadd.f32 %v648, %v884
        %v886 = vpop.f32.mrb[0].mxu0
        %v887 = vpop.f32.mrb[0].mxu0
        %v888 = vadd.f32 %v648, %v887
        %v889 = vpop.f32.mrb[0].mxu0
        %890 = vmatprep.mubr.bf16.mxu0 %v490
        %891 = vmatmul.mubr.bf16.gmra.mrb[0].mxu0 %v489
        %v892 = vpop.f32.mrb[0].mxu0
        %v893 = vadd.f32 %v648, %v892
        %v894 = vpop.f32.mrb[0].mxu0
        %v895 = vpop.f32.mrb[0].mxu0
        %v896 = vadd.f32 %v648, %v895
        %v897 = vpop.f32.mrb[0].mxu0
        %898 = vmatprep.mubr.bf16.mxu0 %v494
        %899 = vmatmul.mubr.bf16.gmra.mrb[0].mxu0 %v493
        %v900 = vpop.f32.mrb[0].mxu0
        %v901 = vadd.f32 %v648, %v900
        %v902 = vpop.f32.mrb[0].mxu0
        %v903 = vpop.f32.mrb[0].mxu0
        %v904 = vadd.f32 %v648, %v903
        %v905 = vpop.f32.mrb[0].mxu0
        %906 = vmatprep.mubr.bf16.mxu0 %v498
        %907 = vmatmul.mubr.bf16.gmra.mrb[0].mxu0 %v497
        %v908 = vpop.f32.mrb[0].mxu0
        %v909 = vadd.f32 %v648, %v908
        %v910 = vpop.f32.mrb[0].mxu0
        %v911 = vpop.f32.mrb[0].mxu0
        %v912 = vadd.f32 %v648, %v911
        %v913 = vpop.f32.mrb[0].mxu0
        %914 = vmatprep.mubr.bf16.mxu0 %v502
        %915 = vmatmul.mubr.bf16.gmra.mrb[0].mxu0 %v501
        %v916 = vpop.f32.mrb[0].mxu0
        %v917 = vadd.f32 %v648, %v916
        %v918 = vpop.f32.mrb[0].mxu0
        %v919 = vpop.f32.mrb[0].mxu0
        %v920 = vadd.f32 %v648, %v919
        %v921 = vpop.f32.mrb[0].mxu0
        %922 = vmatprep.mubr.bf16.mxu0 %v506
        %923 = vmatmul.mubr.bf16.gmra.mrb[0].mxu0 %v505
        %v924 = vpop.f32.mrb[0].mxu0
        %v925 = vadd.f32 %v648, %v924
        %v926 = vpop.f32.mrb[0].mxu0
        %v927 = vpop.f32.mrb[0].mxu0
        %v928 = vadd.f32 %v648, %v927
        %v929 = vpop.f32.mrb[0].mxu0
        %930 = vmatprep.mubr.bf16.mxu0 %v510
        %931 = vmatmul.mubr.bf16.gmra.mrb[0].mxu0 %v509
        %v932 = vpop.f32.mrb[0].mxu0
        %v933 = vadd.f32 %v648, %v932
        %v934 = vpop.f32.mrb[0].mxu0
        %v935 = vpop.f32.mrb[0].mxu0
        %v936 = vadd.f32 %v648, %v935
        %v937 = vpop.f32.mrb[0].mxu0
        %938 = vmatprep.mubr.bf16.mxu0 %v514
        %939 = vmatmul.mubr.bf16.gmra.mrb[0].mxu0 %v513
        %v940 = vpop.f32.mrb[0].mxu0
        %v941 = vadd.f32 %v648, %v940
        %v942 = vpop.f32.mrb[0].mxu0
        %v943 = vpop.f32.mrb[0].mxu0
        %v944 = vadd.f32 %v648, %v943
        %v945 = vpop.f32.mrb[0].mxu0
        %946 = vmatprep.mubr.bf16.mxu0 %v518
        %947 = vmatmul.mubr.bf16.gmra.mrb[0].mxu0 %v517
        %v948 = vpop.f32.mrb[0].mxu0
        %v949 = vadd.f32 %v648, %v948
        %v950 = vpop.f32.mrb[0].mxu0
        %v951 = vpop.f32.mrb[0].mxu0
        %v952 = vadd.f32 %v648, %v951
        %v953 = vpop.f32.mrb[0].mxu0
        %954 = vmatprep.mubr.bf16.mxu0 %v522
        %955 = vmatmul.mubr.bf16.gmra.mrb[0].mxu0 %v521
        %v956 = vpop.f32.mrb[0].mxu0
        %v957 = vadd.f32 %v648, %v956
        %v958 = vpop.f32.mrb[0].mxu0
        %v959 = vpop.f32.mrb[0].mxu0
        %v960 = vadd.f32 %v648, %v959
        %v961 = vpop.f32.mrb[0].mxu0
        %962 = vmatprep.mubr.bf16.mxu0 %v526
        %963 = vmatmul.mubr.bf16.gmra.mrb[0].mxu0 %v525
        %v964 = vpop.f32.mrb[0].mxu0
        %v965 = vadd.f32 %v648, %v964
        %v966 = vpop.f32.mrb[0].mxu0
        %v967 = vpop.f32.mrb[0].mxu0
        %v968 = vadd.f32 %v648, %v967
        %v969 = vpop.f32.mrb[0].mxu0
        %970 = vmatprep.mubr.bf16.mxu0 %v530
        %971 = vmatmul.mubr.bf16.gmra.mrb[0].mxu0 %v529
        %v972 = vpop.f32.mrb[0].mxu0
        %v973 = vadd.f32 %v648, %v972
        %v974 = vpop.f32.mrb[0].mxu0
        %v975 = vpop.f32.mrb[0].mxu0
        %v976 = vadd.f32 %v648, %v975
        %v977 = vpop.f32.mrb[0].mxu0
        %978 = vmatprep.mubr.bf16.mxu0 %v534
        %979 = vmatmul.mubr.bf16.gmra.mrb[0].mxu0 %v533
        %v980 = vpop.f32.mrb[0].mxu0
        %v981 = vadd.f32 %v648, %v980
        %v982 = vpop.f32.mrb[0].mxu0
        %v983 = vpop.f32.mrb[0].mxu0
        %v984 = vadd.f32 %v648, %v983
        %v985 = vpop.f32.mrb[0].mxu0
        %986 = vmatprep.mubr.bf16.mxu0 %v538
        %987 = vmatmul.mubr.bf16.gmra.mrb[0].mxu0 %v537
        %v988 = vpop.f32.mrb[0].mxu0
        %v989 = vadd.f32 %v648, %v988
        %v990 = vpop.f32.mrb[0].mxu0
        %v991 = vpop.f32.mrb[0].mxu0
        %v992 = vadd.f32 %v648, %v991
        %v993 = vpop.f32.mrb[0].mxu0
        %994 = vmatprep.mubr.bf16.mxu0 %v542
        %995 = vmatmul.mubr.bf16.gmra.mrb[0].mxu0 %v541
        %v996 = vpop.f32.mrb[0].mxu0
        %v997 = vadd.f32 %v648, %v996
        %v998 = vpop.f32.mrb[0].mxu0
        %v999 = vpop.f32.mrb[0].mxu0
        %v1000 = vadd.f32 %v648, %v999
        %v1001 = vpop.f32.mrb[0].mxu0
        %1002 = vdwg.mxu0
        %1003 = vmatprep.subr.bf16.mxu0 0
        %1004 = vmatpush1.bf16.msra.mxu0 %v794
        %1005 = vmatprep.subr.bf16.mxu0 0
        %1006 = vmatpush1.bf16.msra.mxu0 %v795
        %1007 = vmatprep.subr.bf16.mxu0 0
        %1008 = vmatpush1.bf16.msra.mxu0 %v796
        %1009 = vmatprep.subr.bf16.mxu0 0
        %1010 = vmatpush1.bf16.msra.mxu0 %v797
        %1011 = vmatprep.subr.bf16.mxu0 0
        %1012 = vmatpush1.bf16.msra.mxu0 %v798
        %1013 = vmatprep.subr.bf16.mxu0 0
        %1014 = vmatpush1.bf16.msra.mxu0 %v799
        %1015 = vmatprep.subr.bf16.mxu0 0
        %1016 = vmatpush1.bf16.msra.mxu0 %v800
        %1017 = vmatprep.subr.bf16.mxu0 0
        %1018 = vmatpush1.bf16.msra.mxu0 %v801
        %1019 = vmatprep.subr.bf16.mxu0 0
        %1020 = vmatpush1.bf16.msra.mxu0 %v802
        %1021 = vmatprep.subr.bf16.mxu0 0
        %1022 = vmatpush1.bf16.msra.mxu0 %v803
        %1023 = vmatprep.subr.bf16.mxu0 0
        %1024 = vmatpush1.bf16.msra.mxu0 %v804
        %1025 = vmatprep.subr.bf16.mxu0 0
        %1026 = vmatpush1.bf16.msra.mxu0 %v805
        %1027 = vmatprep.subr.bf16.mxu0 0
        %1028 = vmatpush1.bf16.msra.mxu0 %v806
        %1029 = vmatprep.subr.bf16.mxu0 0
        %1030 = vmatpush1.bf16.msra.mxu0 %v807
        %1031 = vmatprep.subr.bf16.mxu0 0
        %1032 = vmatpush1.bf16.msra.mxu0 %v808
        %1033 = vmatprep.subr.bf16.mxu0 0
        %1034 = vmatpush1.bf16.msra.mxu0 %v809
        %1035 = vmatprep.mubr.bf16.mxu0 %v484
        %1036 = vmatmul.mubr.bf16.gmra.mrb[0].mxu0 %v483
        %v1037 = vpop.f32.mrb[0].mxu0
        %v1038 = vadd.f32 %v877, %v1037
        %v1039 = vpop.f32.mrb[0].mxu0
        %v1040 = vpop.f32.mrb[0].mxu0
        %v1041 = vadd.f32 %v880, %v1040
        %v1042 = vpop.f32.mrb[0].mxu0
        %1043 = vmatprep.mubr.bf16.mxu0 %v488
        %1044 = vmatmul.mubr.bf16.gmra.mrb[0].mxu0 %v487
        %v1045 = vpop.f32.mrb[0].mxu0
        %v1046 = vadd.f32 %v885, %v1045
        %v1047 = vpop.f32.mrb[0].mxu0
        %v1048 = vpop.f32.mrb[0].mxu0
        %v1049 = vadd.f32 %v888, %v1048
        %v1050 = vpop.f32.mrb[0].mxu0
        %1051 = vmatprep.mubr.bf16.mxu0 %v492
        %1052 = vmatmul.mubr.bf16.gmra.mrb[0].mxu0 %v491
        %v1053 = vpop.f32.mrb[0].mxu0
        %v1054 = vadd.f32 %v893, %v1053
        %v1055 = vpop.f32.mrb[0].mxu0
        %v1056 = vpop.f32.mrb[0].mxu0
        %v1057 = vadd.f32 %v896, %v1056
        %v1058 = vpop.f32.mrb[0].mxu0
        %1059 = vmatprep.mubr.bf16.mxu0 %v496
        %1060 = vmatmul.mubr.bf16.gmra.mrb[0].mxu0 %v495
        %v1061 = vpop.f32.mrb[0].mxu0
        %v1062 = vadd.f32 %v901, %v1061
        %v1063 = vpop.f32.mrb[0].mxu0
        %v1064 = vpop.f32.mrb[0].mxu0
        %v1065 = vadd.f32 %v904, %v1064
        %v1066 = vpop.f32.mrb[0].mxu0
        %1067 = vmatprep.mubr.bf16.mxu0 %v500
        %1068 = vmatmul.mubr.bf16.gmra.mrb[0].mxu0 %v499
        %v1069 = vpop.f32.mrb[0].mxu0
        %v1070 = vadd.f32 %v909, %v1069
        %v1071 = vpop.f32.mrb[0].mxu0
        %v1072 = vpop.f32.mrb[0].mxu0
        %v1073 = vadd.f32 %v912, %v1072
        %v1074 = vpop.f32.mrb[0].mxu0
        %1075 = vmatprep.mubr.bf16.mxu0 %v504
        %1076 = vmatmul.mubr.bf16.gmra.mrb[0].mxu0 %v503
        %v1077 = vpop.f32.mrb[0].mxu0
        %v1078 = vadd.f32 %v917, %v1077
        %v1079 = vpop.f32.mrb[0].mxu0
        %v1080 = vpop.f32.mrb[0].mxu0
        %v1081 = vadd.f32 %v920, %v1080
        %v1082 = vpop.f32.mrb[0].mxu0
        %1083 = vmatprep.mubr.bf16.mxu0 %v508
        %1084 = vmatmul.mubr.bf16.gmra.mrb[0].mxu0 %v507
        %v1085 = vpop.f32.mrb[0].mxu0
        %v1086 = vadd.f32 %v925, %v1085
        %v1087 = vpop.f32.mrb[0].mxu0
        %v1088 = vpop.f32.mrb[0].mxu0
        %v1089 = vadd.f32 %v928, %v1088
        %v1090 = vpop.f32.mrb[0].mxu0
        %1091 = vmatprep.mubr.bf16.mxu0 %v512
        %1092 = vmatmul.mubr.bf16.gmra.mrb[0].mxu0 %v511
        %v1093 = vpop.f32.mrb[0].mxu0
        %v1094 = vadd.f32 %v933, %v1093
        %v1095 = vpop.f32.mrb[0].mxu0
        %v1096 = vpop.f32.mrb[0].mxu0
        %v1097 = vadd.f32 %v936, %v1096
        %v1098 = vpop.f32.mrb[0].mxu0
        %1099 = vmatprep.mubr.bf16.mxu0 %v516
        %1100 = vmatmul.mubr.bf16.gmra.mrb[0].mxu0 %v515
        %v1101 = vpop.f32.mrb[0].mxu0
        %v1102 = vadd.f32 %v941, %v1101
        %v1103 = vpop.f32.mrb[0].mxu0
        %v1104 = vpop.f32.mrb[0].mxu0
        %v1105 = vadd.f32 %v944, %v1104
        %v1106 = vpop.f32.mrb[0].mxu0
        %1107 = vmatprep.mubr.bf16.mxu0 %v520
        %1108 = vmatmul.mubr.bf16.gmra.mrb[0].mxu0 %v519
        %v1109 = vpop.f32.mrb[0].mxu0
        %v1110 = vadd.f32 %v949, %v1109
        %v1111 = vpop.f32.mrb[0].mxu0
        %v1112 = vpop.f32.mrb[0].mxu0
        %v1113 = vadd.f32 %v952, %v1112
        %v1114 = vpop.f32.mrb[0].mxu0
        %1115 = vmatprep.mubr.bf16.mxu0 %v524
        %1116 = vmatmul.mubr.bf16.gmra.mrb[0].mxu0 %v523
        %v1117 = vpop.f32.mrb[0].mxu0
        %v1118 = vadd.f32 %v957, %v1117
        %v1119 = vpop.f32.mrb[0].mxu0
        %v1120 = vpop.f32.mrb[0].mxu0
        %v1121 = vadd.f32 %v960, %v1120
        %v1122 = vpop.f32.mrb[0].mxu0
        %1123 = vmatprep.mubr.bf16.mxu0 %v528
        %1124 = vmatmul.mubr.bf16.gmra.mrb[0].mxu0 %v527
        %v1125 = vpop.f32.mrb[0].mxu0
        %v1126 = vadd.f32 %v965, %v1125
        %v1127 = vpop.f32.mrb[0].mxu0
        %v1128 = vpop.f32.mrb[0].mxu0
        %v1129 = vadd.f32 %v968, %v1128
        %v1130 = vpop.f32.mrb[0].mxu0
        %1131 = vmatprep.mubr.bf16.mxu0 %v532
        %1132 = vmatmul.mubr.bf16.gmra.mrb[0].mxu0 %v531
        %v1133 = vpop.f32.mrb[0].mxu0
        %v1134 = vadd.f32 %v973, %v1133
        %v1135 = vpop.f32.mrb[0].mxu0
        %v1136 = vpop.f32.mrb[0].mxu0
        %v1137 = vadd.f32 %v976, %v1136
        %v1138 = vpop.f32.mrb[0].mxu0
        %1139 = vmatprep.mubr.bf16.mxu0 %v536
        %1140 = vmatmul.mubr.bf16.gmra.mrb[0].mxu0 %v535
        %v1141 = vpop.f32.mrb[0].mxu0
        %v1142 = vadd.f32 %v981, %v1141
        %v1143 = vpop.f32.mrb[0].mxu0
        %v1144 = vpop.f32.mrb[0].mxu0
        %v1145 = vadd.f32 %v984, %v1144
        %v1146 = vpop.f32.mrb[0].mxu0
        %1147 = vmatprep.mubr.bf16.mxu0 %v540
        %1148 = vmatmul.mubr.bf16.gmra.mrb[0].mxu0 %v539
        %v1149 = vpop.f32.mrb[0].mxu0
        %v1150 = vadd.f32 %v989, %v1149
        %v1151 = vpop.f32.mrb[0].mxu0
        %v1152 = vpop.f32.mrb[0].mxu0
        %v1153 = vadd.f32 %v992, %v1152
        %v1154 = vpop.f32.mrb[0].mxu0
        %1155 = vmatprep.mubr.bf16.mxu0 %v544
        %1156 = vmatmul.mubr.bf16.gmra.mrb[0].mxu0 %v543
        %v1157 = vpop.f32.mrb[0].mxu0
        %v1158 = vadd.f32 %v997, %v1157
        %v1159 = vpop.f32.mrb[0].mxu0
        %v1160 = vpop.f32.mrb[0].mxu0
        %v1161 = vadd.f32 %v1000, %v1160
        %v1162 = vpop.f32.mrb[0].mxu0
        %1163 = vdwg.mxu0
        %v1164 = vadd.f32 %v1038, %v610
        %v1165 = vadd.f32 %v1041, %v611
        %v1166 = vadd.f32 %v1046, %v612
        %v1167 = vadd.f32 %v1049, %v613
        %v1168 = vadd.f32 %v1054, %v614
        %v1169 = vadd.f32 %v1057, %v615
        %v1170 = vadd.f32 %v1062, %v616
        %v1171 = vadd.f32 %v1065, %v617
        %v1172 = vadd.f32 %v1070, %v618
        %v1173 = vadd.f32 %v1073, %v619
        %v1174 = vadd.f32 %v1078, %v620
        %v1175 = vadd.f32 %v1081, %v621
        %v1176 = vadd.f32 %v1086, %v622
        %v1177 = vadd.f32 %v1089, %v623
        %v1178 = vadd.f32 %v1094, %v624
        %v1179 = vadd.f32 %v1097, %v625
        %v1180 = vadd.f32 %v1102, %v626
        %v1181 = vadd.f32 %v1105, %v627
        %v1182 = vadd.f32 %v1110, %v628
        %v1183 = vadd.f32 %v1113, %v629
        %v1184 = vadd.f32 %v1118, %v630
        %v1185 = vadd.f32 %v1121, %v631
        %v1186 = vadd.f32 %v1126, %v632
        %v1187 = vadd.f32 %v1129, %v633
        %v1188 = vadd.f32 %v1134, %v634
        %v1189 = vadd.f32 %v1137, %v635
        %v1190 = vadd.f32 %v1142, %v636
        %v1191 = vadd.f32 %v1145, %v637
        %v1192 = vadd.f32 %v1150, %v638
        %v1193 = vadd.f32 %v1153, %v639
        %v1194 = vadd.f32 %v1158, %v640
        %v1195 = vadd.f32 %v1161, %v641
        %1196 = vadd.xlane.f32.xlu0 %v1164
        %v1197 = vpop.xlane.xlu0 %1196
        %1198 = vadd.xlane.f32.xlu0 %v1165
        %v1199 = vpop.xlane.xlu0 %1198
        %1200 = vadd.xlane.f32.xlu0 %v1166
        %v1201 = vpop.xlane.xlu0 %1200
        %1202 = vadd.xlane.f32.xlu0 %v1167
        %v1203 = vpop.xlane.xlu0 %1202
        %1204 = vadd.xlane.f32.xlu0 %v1168
        %v1205 = vpop.xlane.xlu0 %1204
        %1206 = vadd.xlane.f32.xlu0 %v1169
        %v1207 = vpop.xlane.xlu0 %1206
        %1208 = vadd.xlane.f32.xlu0 %v1170
        %v1209 = vpop.xlane.xlu0 %1208
        %1210 = vadd.xlane.f32.xlu0 %v1171
        %v1211 = vpop.xlane.xlu0 %1210
        %1212 = vadd.xlane.f32.xlu0 %v1172
        %v1213 = vpop.xlane.xlu0 %1212
        %1214 = vadd.xlane.f32.xlu0 %v1173
        %v1215 = vpop.xlane.xlu0 %1214
        %1216 = vadd.xlane.f32.xlu0 %v1174
        %v1217 = vpop.xlane.xlu0 %1216
        %1218 = vadd.xlane.f32.xlu0 %v1175
        %v1219 = vpop.xlane.xlu0 %1218
        %1220 = vadd.xlane.f32.xlu0 %v1176
        %v1221 = vpop.xlane.xlu0 %1220
        %1222 = vadd.xlane.f32.xlu0 %v1177
        %v1223 = vpop.xlane.xlu0 %1222
        %1224 = vadd.xlane.f32.xlu0 %v1178
        %v1225 = vpop.xlane.xlu0 %1224
        %1226 = vadd.xlane.f32.xlu0 %v1179
        %v1227 = vpop.xlane.xlu0 %1226
        %1228 = vadd.xlane.f32.xlu0 %v1180
        %v1229 = vpop.xlane.xlu0 %1228
        %1230 = vadd.xlane.f32.xlu0 %v1181
        %v1231 = vpop.xlane.xlu0 %1230
        %1232 = vadd.xlane.f32.xlu0 %v1182
        %v1233 = vpop.xlane.xlu0 %1232
        %1234 = vadd.xlane.f32.xlu0 %v1183
        %v1235 = vpop.xlane.xlu0 %1234
        %1236 = vadd.xlane.f32.xlu0 %v1184
        %v1237 = vpop.xlane.xlu0 %1236
        %1238 = vadd.xlane.f32.xlu0 %v1185
        %v1239 = vpop.xlane.xlu0 %1238
        %1240 = vadd.xlane.f32.xlu0 %v1186
        %v1241 = vpop.xlane.xlu0 %1240
        %1242 = vadd.xlane.f32.xlu0 %v1187
        %v1243 = vpop.xlane.xlu0 %1242
        %1244 = vadd.xlane.f32.xlu0 %v1188
        %v1245 = vpop.xlane.xlu0 %1244
        %1246 = vadd.xlane.f32.xlu0 %v1189
        %v1247 = vpop.xlane.xlu0 %1246
        %1248 = vadd.xlane.f32.xlu0 %v1190
        %v1249 = vpop.xlane.xlu0 %1248
        %1250 = vadd.xlane.f32.xlu0 %v1191
        %v1251 = vpop.xlane.xlu0 %1250
        %1252 = vadd.xlane.f32.xlu0 %v1192
        %v1253 = vpop.xlane.xlu0 %1252
        %1254 = vadd.xlane.f32.xlu0 %v1193
        %v1255 = vpop.xlane.xlu0 %1254
        %1256 = vadd.xlane.f32.xlu0 %v1194
        %v1257 = vpop.xlane.xlu0 %1256
        %1258 = vadd.xlane.f32.xlu0 %v1195
        %v1259 = vpop.xlane.xlu0 %1258
        %v1260 = vmul.f32 %v1197, 0.0078125
        %v1261 = vmul.f32 %v1199, 0.0078125
        %v1262 = vmul.f32 %v1201, 0.0078125
        %v1263 = vmul.f32 %v1203, 0.0078125
        %v1264 = vmul.f32 %v1205, 0.0078125
        %v1265 = vmul.f32 %v1207, 0.0078125
        %v1266 = vmul.f32 %v1209, 0.0078125
        %v1267 = vmul.f32 %v1211, 0.0078125
        %v1268 = vmul.f32 %v1213, 0.0078125
        %v1269 = vmul.f32 %v1215, 0.0078125
        %v1270 = vmul.f32 %v1217, 0.0078125
        %v1271 = vmul.f32 %v1219, 0.0078125
        %v1272 = vmul.f32 %v1221, 0.0078125
        %v1273 = vmul.f32 %v1223, 0.0078125
        %v1274 = vmul.f32 %v1225, 0.0078125
        %v1275 = vmul.f32 %v1227, 0.0078125
        %v1276 = vmul.f32 %v1229, 0.0078125
        %v1277 = vmul.f32 %v1231, 0.0078125
        %v1278 = vmul.f32 %v1233, 0.0078125
        %v1279 = vmul.f32 %v1235, 0.0078125
        %v1280 = vmul.f32 %v1237, 0.0078125
        %v1281 = vmul.f32 %v1239, 0.0078125
        %v1282 = vmul.f32 %v1241, 0.0078125
        %v1283 = vmul.f32 %v1243, 0.0078125
        %v1284 = vmul.f32 %v1245, 0.0078125
        %v1285 = vmul.f32 %v1247, 0.0078125
        %v1286 = vmul.f32 %v1249, 0.0078125
        %v1287 = vmul.f32 %v1251, 0.0078125
        %v1288 = vmul.f32 %v1253, 0.0078125
        %v1289 = vmul.f32 %v1255, 0.0078125
        %v1290 = vmul.f32 %v1257, 0.0078125
        %v1291 = vmul.f32 %v1259, 0.0078125
        %v1292 = vsub.f32 %v1164, %v1260
        %v1293 = vsub.f32 %v1165, %v1261
        %v1294 = vsub.f32 %v1166, %v1262
        %v1295 = vsub.f32 %v1167, %v1263
        %v1296 = vsub.f32 %v1168, %v1264
        %v1297 = vsub.f32 %v1169, %v1265
        %v1298 = vsub.f32 %v1170, %v1266
        %v1299 = vsub.f32 %v1171, %v1267
        %v1300 = vsub.f32 %v1172, %v1268
        %v1301 = vsub.f32 %v1173, %v1269
        %v1302 = vsub.f32 %v1174, %v1270
        %v1303 = vsub.f32 %v1175, %v1271
        %v1304 = vsub.f32 %v1176, %v1272
        %v1305 = vsub.f32 %v1177, %v1273
        %v1306 = vsub.f32 %v1178, %v1274
        %v1307 = vsub.f32 %v1179, %v1275
        %v1308 = vsub.f32 %v1180, %v1276
        %v1309 = vsub.f32 %v1181, %v1277
        %v1310 = vsub.f32 %v1182, %v1278
        %v1311 = vsub.f32 %v1183, %v1279
        %v1312 = vsub.f32 %v1184, %v1280
        %v1313 = vsub.f32 %v1185, %v1281
        %v1314 = vsub.f32 %v1186, %v1282
        %v1315 = vsub.f32 %v1187, %v1283
        %v1316 = vsub.f32 %v1188, %v1284
        %v1317 = vsub.f32 %v1189, %v1285
        %v1318 = vsub.f32 %v1190, %v1286
        %v1319 = vsub.f32 %v1191, %v1287
        %v1320 = vsub.f32 %v1192, %v1288
        %v1321 = vsub.f32 %v1193, %v1289
        %v1322 = vsub.f32 %v1194, %v1290
        %v1323 = vsub.f32 %v1195, %v1291
        %v1324 = vmul.f32 %v1292, %v1292
        %v1325 = vmul.f32 %v1293, %v1293
        %v1326 = vmul.f32 %v1294, %v1294
        %v1327 = vmul.f32 %v1295, %v1295
        %v1328 = vmul.f32 %v1296, %v1296
        %v1329 = vmul.f32 %v1297, %v1297
        %v1330 = vmul.f32 %v1298, %v1298
        %v1331 = vmul.f32 %v1299, %v1299
        %v1332 = vmul.f32 %v1300, %v1300
        %v1333 = vmul.f32 %v1301, %v1301
        %v1334 = vmul.f32 %v1302, %v1302
        %v1335 = vmul.f32 %v1303, %v1303
        %v1336 = vmul.f32 %v1304, %v1304
        %v1337 = vmul.f32 %v1305, %v1305
        %v1338 = vmul.f32 %v1306, %v1306
        %v1339 = vmul.f32 %v1307, %v1307
        %v1340 = vmul.f32 %v1308, %v1308
        %v1341 = vmul.f32 %v1309, %v1309
        %v1342 = vmul.f32 %v1310, %v1310
        %v1343 = vmul.f32 %v1311, %v1311
        %v1344 = vmul.f32 %v1312, %v1312
        %v1345 = vmul.f32 %v1313, %v1313
        %v1346 = vmul.f32 %v1314, %v1314
        %v1347 = vmul.f32 %v1315, %v1315
        %v1348 = vmul.f32 %v1316, %v1316
        %v1349 = vmul.f32 %v1317, %v1317
        %v1350 = vmul.f32 %v1318, %v1318
        %v1351 = vmul.f32 %v1319, %v1319
        %v1352 = vmul.f32 %v1320, %v1320
        %v1353 = vmul.f32 %v1321, %v1321
        %v1354 = vmul.f32 %v1322, %v1322
        %v1355 = vmul.f32 %v1323, %v1323
        %1356 = vadd.xlane.f32.xlu0 %v1324
        %v1357 = vpop.xlane.xlu0 %1356
        %1358 = vadd.xlane.f32.xlu0 %v1325
        %v1359 = vpop.xlane.xlu0 %1358
        %1360 = vadd.xlane.f32.xlu0 %v1326
        %v1361 = vpop.xlane.xlu0 %1360
        %1362 = vadd.xlane.f32.xlu0 %v1327
        %v1363 = vpop.xlane.xlu0 %1362
        %1364 = vadd.xlane.f32.xlu0 %v1328
        %v1365 = vpop.xlane.xlu0 %1364
        %1366 = vadd.xlane.f32.xlu0 %v1329
        %v1367 = vpop.xlane.xlu0 %1366
        %1368 = vadd.xlane.f32.xlu0 %v1330
        %v1369 = vpop.xlane.xlu0 %1368
        %1370 = vadd.xlane.f32.xlu0 %v1331
        %v1371 = vpop.xlane.xlu0 %1370
        %1372 = vadd.xlane.f32.xlu0 %v1332
        %v1373 = vpop.xlane.xlu0 %1372
        %1374 = vadd.xlane.f32.xlu0 %v1333
        %v1375 = vpop.xlane.xlu0 %1374
        %1376 = vadd.xlane.f32.xlu0 %v1334
        %v1377 = vpop.xlane.xlu0 %1376
        %1378 = vadd.xlane.f32.xlu0 %v1335
        %v1379 = vpop.xlane.xlu0 %1378
        %1380 = vadd.xlane.f32.xlu0 %v1336
        %v1381 = vpop.xlane.xlu0 %1380
        %1382 = vadd.xlane.f32.xlu0 %v1337
        %v1383 = vpop.xlane.xlu0 %1382
        %1384 = vadd.xlane.f32.xlu0 %v1338
        %v1385 = vpop.xlane.xlu0 %1384
        %1386 = vadd.xlane.f32.xlu0 %v1339
        %v1387 = vpop.xlane.xlu0 %1386
        %1388 = vadd.xlane.f32.xlu0 %v1340
        %v1389 = vpop.xlane.xlu0 %1388
        %1390 = vadd.xlane.f32.xlu0 %v1341
        %v1391 = vpop.xlane.xlu0 %1390
        %1392 = vadd.xlane.f32.xlu0 %v1342
        %v1393 = vpop.xlane.xlu0 %1392
        %1394 = vadd.xlane.f32.xlu0 %v1343
        %v1395 = vpop.xlane.xlu0 %1394
        %1396 = vadd.xlane.f32.xlu0 %v1344
        %v1397 = vpop.xlane.xlu0 %1396
        %1398 = vadd.xlane.f32.xlu0 %v1345
        %v1399 = vpop.xlane.xlu0 %1398
        %1400 = vadd.xlane.f32.xlu0 %v1346
        %v1401 = vpop.xlane.xlu0 %1400
        %1402 = vadd.xlane.f32.xlu0 %v1347
        %v1403 = vpop.xlane.xlu0 %1402
        %1404 = vadd.xlane.f32.xlu0 %v1348
        %v1405 = vpop.xlane.xlu0 %1404
        %1406 = vadd.xlane.f32.xlu0 %v1349
        %v1407 = vpop.xlane.xlu0 %1406
        %1408 = vadd.xlane.f32.xlu0 %v1350
        %v1409 = vpop.xlane.xlu0 %1408
        %1410 = vadd.xlane.f32.xlu0 %v1351
        %v1411 = vpop.xlane.xlu0 %1410
        %1412 = vadd.xlane.f32.xlu0 %v1352
        %v1413 = vpop.xlane.xlu0 %1412
        %1414 = vadd.xlane.f32.xlu0 %v1353
        %v1415 = vpop.xlane.xlu0 %1414
        %1416 = vadd.xlane.f32.xlu0 %v1354
        %v1417 = vpop.xlane.xlu0 %1416
        %1418 = vadd.xlane.f32.xlu0 %v1355
        %v1419 = vpop.xlane.xlu0 %1418
        %v1420 = vmul.f32 %v1357, 0.0078125
        %v1421 = vmul.f32 %v1359, 0.0078125
        %v1422 = vmul.f32 %v1361, 0.0078125
        %v1423 = vmul.f32 %v1363, 0.0078125
        %v1424 = vmul.f32 %v1365, 0.0078125
        %v1425 = vmul.f32 %v1367, 0.0078125
        %v1426 = vmul.f32 %v1369, 0.0078125
        %v1427 = vmul.f32 %v1371, 0.0078125
        %v1428 = vmul.f32 %v1373, 0.0078125
        %v1429 = vmul.f32 %v1375, 0.0078125
        %v1430 = vmul.f32 %v1377, 0.0078125
        %v1431 = vmul.f32 %v1379, 0.0078125
        %v1432 = vmul.f32 %v1381, 0.0078125
        %v1433 = vmul.f32 %v1383, 0.0078125
        %v1434 = vmul.f32 %v1385, 0.0078125
        %v1435 = vmul.f32 %v1387, 0.0078125
        %v1436 = vmul.f32 %v1389, 0.0078125
        %v1437 = vmul.f32 %v1391, 0.0078125
        %v1438 = vmul.f32 %v1393, 0.0078125
        %v1439 = vmul.f32 %v1395, 0.0078125
        %v1440 = vmul.f32 %v1397, 0.0078125
        %v1441 = vmul.f32 %v1399, 0.0078125
        %v1442 = vmul.f32 %v1401, 0.0078125
        %v1443 = vmul.f32 %v1403, 0.0078125
        %v1444 = vmul.f32 %v1405, 0.0078125
        %v1445 = vmul.f32 %v1407, 0.0078125
        %v1446 = vmul.f32 %v1409, 0.0078125
        %v1447 = vmul.f32 %v1411, 0.0078125
        %v1448 = vmul.f32 %v1413, 0.0078125
        %v1449 = vmul.f32 %v1415, 0.0078125
        %v1450 = vmul.f32 %v1417, 0.0078125
        %v1451 = vmul.f32 %v1419, 0.0078125
        %v1452 = vadd.f32 %v1420, 1e-12
        %v1453 = vadd.f32 %v1421, 1e-12
        %v1454 = vadd.f32 %v1422, 1e-12
        %v1455 = vadd.f32 %v1423, 1e-12
        %v1456 = vadd.f32 %v1424, 1e-12
        %v1457 = vadd.f32 %v1425, 1e-12
        %v1458 = vadd.f32 %v1426, 1e-12
        %v1459 = vadd.f32 %v1427, 1e-12
        %v1460 = vadd.f32 %v1428, 1e-12
        %v1461 = vadd.f32 %v1429, 1e-12
        %v1462 = vadd.f32 %v1430, 1e-12
        %v1463 = vadd.f32 %v1431, 1e-12
        %v1464 = vadd.f32 %v1432, 1e-12
        %v1465 = vadd.f32 %v1433, 1e-12
        %v1466 = vadd.f32 %v1434, 1e-12
        %v1467 = vadd.f32 %v1435, 1e-12
        %v1468 = vadd.f32 %v1436, 1e-12
        %v1469 = vadd.f32 %v1437, 1e-12
        %v1470 = vadd.f32 %v1438, 1e-12
        %v1471 = vadd.f32 %v1439, 1e-12
        %v1472 = vadd.f32 %v1440, 1e-12
        %v1473 = vadd.f32 %v1441, 1e-12
        %v1474 = vadd.f32 %v1442, 1e-12
        %v1475 = vadd.f32 %v1443, 1e-12
        %v1476 = vadd.f32 %v1444, 1e-12
        %v1477 = vadd.f32 %v1445, 1e-12
        %v1478 = vadd.f32 %v1446, 1e-12
        %v1479 = vadd.f32 %v1447, 1e-12
        %v1480 = vadd.f32 %v1448, 1e-12
        %v1481 = vadd.f32 %v1449, 1e-12
        %v1482 = vadd.f32 %v1450, 1e-12
        %v1483 = vadd.f32 %v1451, 1e-12
        %v1484 = vrsqrt.pop %v1452
        %v1485 = vrsqrt.pop %v1453
        %v1486 = vrsqrt.pop %v1454
        %v1487 = vrsqrt.pop %v1455
        %v1488 = vrsqrt.pop %v1456
        %v1489 = vrsqrt.pop %v1457
        %v1490 = vrsqrt.pop %v1458
        %v1491 = vrsqrt.pop %v1459
        %v1492 = vrsqrt.pop %v1460
        %v1493 = vrsqrt.pop %v1461
        %v1494 = vrsqrt.pop %v1462
        %v1495 = vrsqrt.pop %v1463
        %v1496 = vrsqrt.pop %v1464
        %v1497 = vrsqrt.pop %v1465
        %v1498 = vrsqrt.pop %v1466
        %v1499 = vrsqrt.pop %v1467
        %v1500 = vrsqrt.pop %v1468
        %v1501 = vrsqrt.pop %v1469
        %v1502 = vrsqrt.pop %v1470
        %v1503 = vrsqrt.pop %v1471
        %v1504 = vrsqrt.pop %v1472
        %v1505 = vrsqrt.pop %v1473
        %v1506 = vrsqrt.pop %v1474
        %v1507 = vrsqrt.pop %v1475
        %v1508 = vrsqrt.pop %v1476
        %v1509 = vrsqrt.pop %v1477
        %v1510 = vrsqrt.pop %v1478
        %v1511 = vrsqrt.pop %v1479
        %v1512 = vrsqrt.pop %v1480
        %v1513 = vrsqrt.pop %v1481
        %v1514 = vrsqrt.pop %v1482
        %v1515 = vrsqrt.pop %v1483
        %v1516 = vmul.f32 %v1292, %v1484
        %v1517 = vmul.f32 %v1293, %v1485
        %v1518 = vmul.f32 %v1294, %v1486
        %v1519 = vmul.f32 %v1295, %v1487
        %v1520 = vmul.f32 %v1296, %v1488
        %v1521 = vmul.f32 %v1297, %v1489
        %v1522 = vmul.f32 %v1298, %v1490
        %v1523 = vmul.f32 %v1299, %v1491
        %v1524 = vmul.f32 %v1300, %v1492
        %v1525 = vmul.f32 %v1301, %v1493
        %v1526 = vmul.f32 %v1302, %v1494
        %v1527 = vmul.f32 %v1303, %v1495
        %v1528 = vmul.f32 %v1304, %v1496
        %v1529 = vmul.f32 %v1305, %v1497
        %v1530 = vmul.f32 %v1306, %v1498
        %v1531 = vmul.f32 %v1307, %v1499
        %v1532 = vmul.f32 %v1308, %v1500
        %v1533 = vmul.f32 %v1309, %v1501
        %v1534 = vmul.f32 %v1310, %v1502
        %v1535 = vmul.f32 %v1311, %v1503
        %v1536 = vmul.f32 %v1312, %v1504
        %v1537 = vmul.f32 %v1313, %v1505
        %v1538 = vmul.f32 %v1314, %v1506
        %v1539 = vmul.f32 %v1315, %v1507
        %v1540 = vmul.f32 %v1316, %v1508
        %v1541 = vmul.f32 %v1317, %v1509
        %v1542 = vmul.f32 %v1318, %v1510
        %v1543 = vmul.f32 %v1319, %v1511
        %v1544 = vmul.f32 %v1320, %v1512
        %v1545 = vmul.f32 %v1321, %v1513
        %v1546 = vmul.f32 %v1322, %v1514
        %v1547 = vmul.f32 %v1323, %v1515
        %v1549 = vlaneseq
        %v1550 = vshrl.u32 %v1549, 7
        %v1551 = vsub.s32 0, %v1550
        %v1552 = vrot.slane %v642, %v1551
        %v1554 = vmul.f32 %v1516, %v1552
        %v1555 = vmul.f32 %v1517, %v1552
        %v1556 = vmul.f32 %v1518, %v1552
        %v1557 = vmul.f32 %v1519, %v1552
        %v1558 = vmul.f32 %v1520, %v1552
        %v1559 = vmul.f32 %v1521, %v1552
        %v1560 = vmul.f32 %v1522, %v1552
        %v1561 = vmul.f32 %v1523, %v1552
        %v1562 = vmul.f32 %v1524, %v1552
        %v1563 = vmul.f32 %v1525, %v1552
        %v1564 = vmul.f32 %v1526, %v1552
        %v1565 = vmul.f32 %v1527, %v1552
        %v1566 = vmul.f32 %v1528, %v1552
        %v1567 = vmul.f32 %v1529, %v1552
        %v1568 = vmul.f32 %v1530, %v1552
        %v1569 = vmul.f32 %v1531, %v1552
        %v1570 = vmul.f32 %v1532, %v1552
        %v1571 = vmul.f32 %v1533, %v1552
        %v1572 = vmul.f32 %v1534, %v1552
        %v1573 = vmul.f32 %v1535, %v1552
        %v1574 = vmul.f32 %v1536, %v1552
        %v1575 = vmul.f32 %v1537, %v1552
        %v1576 = vmul.f32 %v1538, %v1552
        %v1577 = vmul.f32 %v1539, %v1552
        %v1578 = vmul.f32 %v1540, %v1552
        %v1579 = vmul.f32 %v1541, %v1552
        %v1580 = vmul.f32 %v1542, %v1552
        %v1581 = vmul.f32 %v1543, %v1552
        %v1582 = vmul.f32 %v1544, %v1552
        %v1583 = vmul.f32 %v1545, %v1552
        %v1584 = vmul.f32 %v1546, %v1552
        %v1585 = vmul.f32 %v1547, %v1552
        %v1587 = vlaneseq
        %v1588 = vshrl.u32 %v1587, 7
        %v1589 = vsub.s32 0, %v1588
        %v1590 = vrot.slane %v643, %v1589
        %v1592 = vadd.f32 %v1554, %v1590
        %v1593 = vadd.f32 %v1555, %v1590
        %v1594 = vadd.f32 %v1556, %v1590
        %v1595 = vadd.f32 %v1557, %v1590
        %v1596 = vadd.f32 %v1558, %v1590
        %v1597 = vadd.f32 %v1559, %v1590
        %v1598 = vadd.f32 %v1560, %v1590
        %v1599 = vadd.f32 %v1561, %v1590
        %v1600 = vadd.f32 %v1562, %v1590
        %v1601 = vadd.f32 %v1563, %v1590
        %v1602 = vadd.f32 %v1564, %v1590
        %v1603 = vadd.f32 %v1565, %v1590
        %v1604 = vadd.f32 %v1566, %v1590
        %v1605 = vadd.f32 %v1567, %v1590
        %v1606 = vadd.f32 %v1568, %v1590
        %v1607 = vadd.f32 %v1569, %v1590
        %v1608 = vadd.f32 %v1570, %v1590
        %v1609 = vadd.f32 %v1571, %v1590
        %v1610 = vadd.f32 %v1572, %v1590
        %v1611 = vadd.f32 %v1573, %v1590
        %v1612 = vadd.f32 %v1574, %v1590
        %v1613 = vadd.f32 %v1575, %v1590
        %v1614 = vadd.f32 %v1576, %v1590
        %v1615 = vadd.f32 %v1577, %v1590
        %v1616 = vadd.f32 %v1578, %v1590
        %v1617 = vadd.f32 %v1579, %v1590
        %v1618 = vadd.f32 %v1580, %v1590
        %v1619 = vadd.f32 %v1581, %v1590
        %v1620 = vadd.f32 %v1582, %v1590
        %v1621 = vadd.f32 %v1583, %v1590
        %v1622 = vadd.f32 %v1584, %v1590
        %v1623 = vadd.f32 %v1585, %v1590
        %1624 = vst [vmem:[%s335] sm:$0xff] %v1592
        %1625 = vst [vmem:[%s335 + $0x8] sm:$0xff] %v1593
        %1626 = vst [vmem:[%s335 + $0x10] sm:$0xff] %v1594
        %1627 = vst [vmem:[%s335 + $0x18] sm:$0xff] %v1595
        %1628 = vst [vmem:[%s335 + $0x20] sm:$0xff] %v1596
        %1629 = vst [vmem:[%s335 + $0x28] sm:$0xff] %v1597
        %1630 = vst [vmem:[%s335 + $0x30] sm:$0xff] %v1598
        %1631 = vst [vmem:[%s335 + $0x38] sm:$0xff] %v1599
        %1632 = vst [vmem:[%s335 + $0x40] sm:$0xff] %v1600
        %1633 = vst [vmem:[%s335 + $0x48] sm:$0xff] %v1601
        %1634 = vst [vmem:[%s335 + $0x50] sm:$0xff] %v1602
        %1635 = vst [vmem:[%s335 + $0x58] sm:$0xff] %v1603
        %1636 = vst [vmem:[%s335 + $0x60] sm:$0xff] %v1604
        %1637 = vst [vmem:[%s335 + $0x68] sm:$0xff] %v1605
        %1638 = vst [vmem:[%s335 + $0x70] sm:$0xff] %v1606
        %1639 = vst [vmem:[%s335 + $0x78] sm:$0xff] %v1607
        %1640 = vst [vmem:[%s335 + $0x80] sm:$0xff] %v1608
        %1641 = vst [vmem:[%s335 + $0x88] sm:$0xff] %v1609
        %1642 = vst [vmem:[%s335 + $0x90] sm:$0xff] %v1610
        %1643 = vst [vmem:[%s335 + $0x98] sm:$0xff] %v1611
        %1644 = vst [vmem:[%s335 + $0xa0] sm:$0xff] %v1612
        %1645 = vst [vmem:[%s335 + $0xa8] sm:$0xff] %v1613
        %1646 = vst [vmem:[%s335 + $0xb0] sm:$0xff] %v1614
        %1647 = vst [vmem:[%s335 + $0xb8] sm:$0xff] %v1615
        %1648 = vst [vmem:[%s335 + $0xc0] sm:$0xff] %v1616
        %1649 = vst [vmem:[%s335 + $0xc8] sm:$0xff] %v1617
        %1650 = vst [vmem:[%s335 + $0xd0] sm:$0xff] %v1618
        %1651 = vst [vmem:[%s335 + $0xd8] sm:$0xff] %v1619
        %1652 = vst [vmem:[%s335 + $0xe0] sm:$0xff] %v1620
        %1653 = vst [vmem:[%s335 + $0xe8] sm:$0xff] %v1621
        %1654 = vst [vmem:[%s335 + $0xf0] sm:$0xff] %v1622
        %1655 = vst [vmem:[%s335 + $0xf8] sm:$0xff] %v1623
        %s1656 = sand.u32 %s168, 1
        %s1657 = scalar_lea.sflag [#allocation4], %s1656
        %s1658 = sand.u32 %s168, 1
        %s1659 = smul.addr %s1658, 256
        %s1660 = scalar_lea.vmem [#allocation8], %s1659
        // Predicated region
        $region57: #{tpu_custom_call.1} parent=43 // pred_check
          %p1661 = pneg %p178
        $region58: #{tpu_custom_call.1} parent=43 // pred_check_branch
          %1663 = sbr.rel (%p1661) target = $region60
        $region59: #{tpu_custom_call.1} parent=43 // pred_region
          %s1664 = smul.u32 32, %s24
          %s1665 = ssub.s32 48, %s1664
          %p1666 = scmp.lt.s32.totalorder %s1665, 32
          %s1667 = scalar_select %p1666, %s1665, 32
          %s1668 = smul.u32 128, %s1667
          %s1670 = ssub.s32 4096, %s1668
          %1671 = vsyncadd %s1657, %s1670
          %p1672 = scmp.ne.s32.totalorder 0, %s1668
          %s1673 = smul.addr %s1664, 128
          %s1674 = scalar_lea.hbm %s6, %s1673
          %s1675 = smul.u32 8, %s1667
          %s1676 = sshll.u32 %s1660, 4
          %s1677 = int_to_ptr.vmem [resolvable:$true] %s1676
          %s1678 = sshll.u32 %s1675, 4
          %1682 = dma.vmem_to_hbm [thread:$0]  (%p1672), %s1677, %s1678, %s1674, %s1657, 128, 128, 8
        $region60: #{tpu_custom_call.1} parent=43 // pred_fallthru
          _
      $region44: #{tpu_custom_call.1} parent=5 // pred_fallthru
        _
      %p1683 = scmp.le.s32.totalorder 2, %s19
      // Predicated region
      $region61: #{tpu_custom_call.1} parent=5 // pred_check
        %p1684 = pneg %p1683
      $region62: #{tpu_custom_call.1} parent=5 // pred_check_branch
        %1686 = sbr.rel (%p1684) target = $region64
      $region63: #{tpu_custom_call.1} parent=5 // pred_region
        %s1687 = ssub.s32 %s19, 2
        // Predicated region
        $region65: #{tpu_custom_call.1} parent=63 // pred_check
          %p1688 = pneg %p184
        $region66: #{tpu_custom_call.1} parent=63 // pred_check_branch
          %1690 = sbr.rel (%p1688) target = $region68
        $region67: #{tpu_custom_call.1} parent=63 // pred_region
          %s1691 = sand.u32 %s169, 1
          %s1692 = scalar_lea.sflag [#allocation4], %s1691
          %s1693 = sand.u32 %s169, 1
          %s1694 = smul.addr %s1693, 256
          %s1695 = scalar_lea.vmem [#allocation8], %s1694
          %1696 = dma.done %s1692, 4096
        $region68: #{tpu_custom_call.1} parent=63 // pred_fallthru
          _
      $region64: #{tpu_custom_call.1} parent=5 // pred_fallthru
        _
    $region6: #{tpu_custom_call.1} parent=1 // loop_footer
      %s23 = sadd.s32 1, %s19
    $region7: #{tpu_custom_call.1} parent=1 // loop_footer_branch
      %18 = sbr.rel target = $region3
    $region8: #{tpu_custom_call.1} parent=1 // loop_exit
      _
    %1697 = vsyncpa [#allocation3], 1
    %s1698 = scalar_lea.sflag [#allocation3], 1
    %1699 = vsyncpa %s1698, 1
    %1700 = vsyncpa [#allocation6], 1
    %1701 = vsyncpa [#allocation4], 1
    %s1702 = scalar_lea.sflag [#allocation4], 1
    %1703 = vsyncpa %s1702, 1

</llo_original>
